<compile_context>
chip_gen: v6e
topology: v6e:2x2x1
jax: 0.10.0
libtpu: 0.0.40
codegen_flags: <defaults>
</compile_context>

<pallas_src>
import jax
import jax.numpy as jnp
from jax.experimental import pallas as pl
from jax.experimental.pallas import tpu as pltpu

HIDDEN_SIZE = 1000
CHANNELS = 3
INPUT_SIZE = CHANNELS * 1024  # 3072
NUM_CLASSES = 10

LANE = 128
SUBLANE = 8


def _round_up(n, m):
    return ((n + m - 1) // m) * m


def mlp_kernel(x_ref, w1_ref, b1_ref, w2_ref, b2_ref, o_ref, acc_ref):
    j = pl.program_id(1)  # hidden (reduction) tile index

    @pl.when(j == 0)
    def _init():
        acc_ref[...] = jnp.zeros_like(acc_ref)

    # fc1 partial: (tb, in) @ (in, th) -- bf16 MXU inputs, f32 accumulation.
    h = jnp.dot(x_ref[...], w1_ref[...], preferred_element_type=jnp.float32)
    h = jnp.maximum(h + b1_ref[...], 0.0)  # bias + ReLU for this hidden tile

    # fc2 partial: this hidden tile's contribution to the (tb, 10) logits.
    acc_ref[...] += jnp.dot(h, w2_ref[...], preferred_element_type=jnp.float32)

    @pl.when(j == pl.num_programs(1) - 1)
    def _finalize():
        logits = acc_ref[...] + b2_ref[...]
        m = jnp.max(logits, axis=1, keepdims=True)
        e = jnp.exp(logits - m)
        o_ref[...] = (e / jnp.sum(e, axis=1, keepdims=True)).astype(o_ref.dtype)


def prepare_params(w1, b1, w2, b2):
    """Pad the hidden dim to a multiple of 128 lanes and cast W1 to bf16.

    Padded hidden units are inert: W1 column = 0 and b1 = 0 give relu(0) = 0,
    and the corresponding zero rows of W2 contribute nothing to the logits.
    W2/b1/b2 stay f32 (they are tiny; only W1 traffic matters).
    """
    hid = w1.shape[1]
    hid_p = _round_up(hid, LANE)
    pad = hid_p - hid
    w1p = jnp.pad(w1, ((0, 0), (0, pad))).astype(jnp.bfloat16)
    b1p = jnp.pad(b1, ((0, pad),)).reshape(1, hid_p).astype(jnp.float32)
    w2p = jnp.pad(w2, ((0, pad), (0, 0))).astype(jnp.float32)
    b2p = b2.reshape(1, -1).astype(jnp.float32)
    return w1p, b1p, w2p, b2p


def net_forward(x, w1, b1, w2, b2, *, block_h=256, max_block_b=128):
    w1p, b1p, w2p, b2p = prepare_params(w1, b1, w2, b2)

    B, in_f = x.shape
    hid_p = w1p.shape[1]
    n_cls = w2p.shape[1]

    block_h = min(block_h, hid_p)
    while hid_p % block_h:
        block_h //= 2

    # Batch tiling: pad to sublane multiple, tile at up to 128 rows so weight
    # DMA is amortized over many MXU rows when the batch is large.
    b8 = _round_up(B, SUBLANE)
    block_b = min(max_block_b, b8)
    bp = _round_up(b8, block_b)

    x_p = x.astype(jnp.bfloat16)
    if bp != B:
        x_p = jnp.pad(x_p, ((0, bp - B), (0, 0)))

    grid = (bp // block_b, hid_p // block_h)

    out = pl.pallas_call(
        mlp_kernel,
        out_shape=jax.ShapeDtypeStruct((bp, n_cls), jnp.float32),
        grid_spec=pltpu.PrefetchScalarGridSpec(
            num_scalar_prefetch=0,
            grid=grid,
            in_specs=[
                pl.BlockSpec((block_b, in_f), lambda i, j: (i, 0)),   # x (bf16)
                pl.BlockSpec((in_f, block_h), lambda i, j: (0, j)),   # W1 (bf16)
                pl.BlockSpec((1, block_h), lambda i, j: (0, j)),      # b1
                pl.BlockSpec((block_h, n_cls), lambda i, j: (j, 0)),  # W2
                pl.BlockSpec((1, n_cls), lambda i, j: (0, 0)),        # b2
            ],
            out_specs=pl.BlockSpec((block_b, n_cls), lambda i, j: (i, 0)),
            scratch_shapes=[pltpu.VMEM((block_b, n_cls), jnp.float32)],
        ),
        compiler_params=pltpu.CompilerParams(
            dimension_semantics=("parallel", "arbitrary"),
            vmem_limit_bytes=32 * 1024 * 1024,  # ~5 MB actually used; < v7x 64 MiB
        ),
    )(x_p, w1p, b1p, w2p, b2p)

    return out[:B]


def init_params(key):
    """nn.Linear-style init U(-1/sqrt(fan_in), 1/sqrt(fan_in)).

    Weights are generated directly in (in_features, out_features) layout, i.e.
    the transpose of PyTorch's (out, in) storage; the math is identical.
    """
    k1, k2, k3, k4 = jax.random.split(key, 4)
    lim1 = 1.0 / jnp.sqrt(jnp.float32(INPUT_SIZE))
    lim2 = 1.0 / jnp.sqrt(jnp.float32(HIDDEN_SIZE))
    w1 = jax.random.uniform(k1, (INPUT_SIZE, HIDDEN_SIZE), jnp.float32, -lim1, lim1)
    b1 = jax.random.uniform(k2, (HIDDEN_SIZE,), jnp.float32, -lim1, lim1)
    w2 = jax.random.uniform(k3, (HIDDEN_SIZE, NUM_CLASSES), jnp.float32, -lim2, lim2)
    b2 = jax.random.uniform(k4, (NUM_CLASSES,), jnp.float32, -lim2, lim2)
    return w1, b1, w2, b2


if __name__ == "__main__":
    key = jax.random.PRNGKey(0)
    kx, kp = jax.random.split(key)

    BATCH = 8
    # x: flattened 3x32x32 CIFAR image per row, shape (B, 3072)
    x = jax.random.normal(kx, (BATCH, INPUT_SIZE), jnp.float32)
    w1, b1, w2, b2 = init_params(kp)

    out = net_forward(x, w1, b1, w2, b2)
    out = jax.block_until_ready(out)

    # Reference applies the same bf16 casts the kernel uses for x and W1 so
    # the comparison isolates kernel structure (tiling / accumulation order),
    # not dtype; fc2 stays f32 in both.
    xb = x.astype(jnp.bfloat16).astype(jnp.float32)
    w1b = w1.astype(jnp.bfloat16).astype(jnp.float32)
    h_ref = jnp.maximum(
        jnp.dot(xb, w1b, precision=jax.lax.Precision.HIGHEST) + b1, 0.0)
    logits_ref = jnp.dot(h_ref, w2, precision=jax.lax.Precision.HIGHEST) + b2
    ref = jax.nn.softmax(logits_ref, axis=1)

    assert out.shape == (BATCH, NUM_CLASSES)
    assert jnp.allclose(out, ref, atol=3e-3, rtol=3e-3), "mismatch vs reference"
    assert jnp.allclose(jnp.sum(out, axis=1), 1.0, atol=1e-5), "softmax rows must sum to 1"

    print("KERNEL_OK")
</pallas_src>

<mosaic_0001>
module attributes {stable_mosaic.version = 11 : i64} {
  func.func @mlp_kernel(%arg0: i32, %arg1: i32, %arg2: memref<8x3072xbf16, #tpu.memory_space<vmem>>, %arg3: memref<3072x256xbf16, #tpu.memory_space<vmem>>, %arg4: memref<1x256xf32, #tpu.memory_space<vmem>>, %arg5: memref<256x10xf32, #tpu.memory_space<vmem>>, %arg6: memref<1x10xf32, #tpu.memory_space<vmem>>, %arg7: memref<8x10xf32, #tpu.memory_space<vmem>>, %arg8: memref<8x10xf32, #tpu.memory_space<vmem>>) attributes {dimension_semantics = [#tpu.dimension_semantics<parallel>, #tpu.dimension_semantics<arbitrary>], iteration_bounds = array<i64: 1, 4>, scalar_prefetch = 0 : i64, scratch_operands = 1 : i64, tpu.core_type = #tpu.core_type<tc>, window_params = [{transform_indices = @transform_0, window_bounds = array<i64: 8, 3072>}, {transform_indices = @transform_1, window_bounds = array<i64: 3072, 256>}, {transform_indices = @transform_2, window_bounds = array<i64: 1, 256>}, {transform_indices = @transform_3, window_bounds = array<i64: 256, 10>}, {pipeline_mode = #tpu.pipeline_mode<synchronous>, transform_indices = @transform_4, window_bounds = array<i64: 1, 10>}, {transform_indices = @transform_5, window_bounds = array<i64: 8, 10>}]} {
    %c0_i32 = arith.constant 0 : i32
    %0 = arith.cmpi eq, %arg1, %c0_i32 : i32
    %1 = arith.extui %0 : i1 to i32
    %c0_i32_0 = arith.constant 0 : i32
    %2 = arith.cmpi ne, %1, %c0_i32_0 : i32
    scf.if %2 {
      %cst_15 = arith.constant 0.000000e+00 : f32
      %19 = vector.broadcast %cst_15 : f32 to vector<8x10xf32>
      %c0_16 = arith.constant 0 : index
      %c0_17 = arith.constant 0 : index
      %20 = vector.load %arg8[%c0_16, %c0_17] : memref<8x10xf32, #tpu.memory_space<vmem>>, vector<8x10xf32>
      tpu.vector_store %arg8[%c0_16, %c0_17], %19 {strides = array<i32>} : memref<8x10xf32, #tpu.memory_space<vmem>>, vector<8x10xf32>,
    } else {
    }
    %c0 = arith.constant 0 : index
    %c0_1 = arith.constant 0 : index
    %3 = vector.load %arg2[%c0, %c0_1] : memref<8x3072xbf16, #tpu.memory_space<vmem>>, vector<8x3072xbf16>
    %c0_2 = arith.constant 0 : index
    %c0_3 = arith.constant 0 : index
    %4 = vector.load %arg3[%c0_2, %c0_3] : memref<3072x256xbf16, #tpu.memory_space<vmem>>, vector<3072x256xbf16>
    %cst = arith.constant dense<0.000000e+00> : vector<8x256xf32>
    %5 = tpu.matmul %3, %4, %cst {dimension_numbers = #tpu.dot_dimension_numbers<[1], [0], [0], [1], [0, 0, 1, 1], [], []>} : vector<8x3072xbf16>, vector<3072x256xbf16>, vector<8x256xf32> -> vector<8x256xf32>
    %c0_4 = arith.constant 0 : index
    %c0_5 = arith.constant 0 : index
    %6 = vector.load %arg4[%c0_4, %c0_5] : memref<1x256xf32, #tpu.memory_space<vmem>>, vector<1x256xf32>
    %7 = vector.broadcast %6 : vector<1x256xf32> to vector<8x256xf32>
    %8 = arith.addf %5, %7 : vector<8x256xf32>
    %cst_6 = arith.constant 0.000000e+00 : f32
    %9 = vector.broadcast %cst_6 : f32 to vector<8x256xf32>
    %10 = arith.maximumf %8, %9 : vector<8x256xf32>
    %c0_7 = arith.constant 0 : index
    %c0_8 = arith.constant 0 : index
    %11 = vector.load %arg8[%c0_7, %c0_8] : memref<8x10xf32, #tpu.memory_space<vmem>>, vector<8x10xf32>
    %c0_9 = arith.constant 0 : index
    %c0_10 = arith.constant 0 : index
    %12 = vector.load %arg5[%c0_9, %c0_10] : memref<256x10xf32, #tpu.memory_space<vmem>>, vector<256x10xf32>
    %cst_11 = arith.constant dense<0.000000e+00> : vector<8x10xf32>
    %13 = tpu.matmul %10, %12, %cst_11 {dimension_numbers = #tpu.dot_dimension_numbers<[1], [0], [0], [1], [0, 0, 1, 1], [], []>} : vector<8x256xf32>, vector<256x10xf32>, vector<8x10xf32> -> vector<8x10xf32>
    %14 = arith.addf %11, %13 : vector<8x10xf32>
    %c0_12 = arith.constant 0 : index
    %c0_13 = arith.constant 0 : index
    %15 = vector.load %arg8[%c0_12, %c0_13] : memref<8x10xf32, #tpu.memory_space<vmem>>, vector<8x10xf32>
    tpu.vector_store %arg8[%c0_12, %c0_13], %14 {strides = array<i32>} : memref<8x10xf32, #tpu.memory_space<vmem>>, vector<8x10xf32>,
    %c3_i32 = arith.constant 3 : i32
    %16 = arith.cmpi eq, %arg1, %c3_i32 : i32
    %17 = arith.extui %16 : i1 to i32
    %c0_i32_14 = arith.constant 0 : i32
    %18 = arith.cmpi ne, %17, %c0_i32_14 : i32
    scf.if %18 {
      %c0_15 = arith.constant 0 : index
      %c0_16 = arith.constant 0 : index
      %19 = vector.load %arg8[%c0_15, %c0_16] : memref<8x10xf32, #tpu.memory_space<vmem>>, vector<8x10xf32>
      %c0_17 = arith.constant 0 : index
      %c0_18 = arith.constant 0 : index
      %20 = vector.load %arg6[%c0_17, %c0_18] : memref<1x10xf32, #tpu.memory_space<vmem>>, vector<1x10xf32>
      %21 = vector.broadcast %20 : vector<1x10xf32> to vector<8x10xf32>
      %22 = arith.addf %19, %21 : vector<8x10xf32>
      %cst_19 = arith.constant dense<0xFF800000> : vector<8xf32>
      %23 = vector.multi_reduction <maximumf>, %22, %cst_19 [1] : vector<8x10xf32> to vector<8xf32>
      %24 = vector.shape_cast %23 : vector<8xf32> to vector<8x1xf32>
      %25 = vector.broadcast %24 : vector<8x1xf32> to vector<8x10xf32>
      %26 = arith.subf %22, %25 : vector<8x10xf32>
      %27 = math.exp %26 : vector<8x10xf32>
      %cst_20 = arith.constant dense<0.000000e+00> : vector<8xf32>
      %28 = vector.multi_reduction <add>, %27, %cst_20 [1] : vector<8x10xf32> to vector<8xf32>
      %29 = vector.shape_cast %28 : vector<8xf32> to vector<8x1xf32>
      %30 = vector.broadcast %29 : vector<8x1xf32> to vector<8x10xf32>
      %31 = arith.divf %27, %30 : vector<8x10xf32>
      %c0_21 = arith.constant 0 : index
      %c0_22 = arith.constant 0 : index
      %32 = vector.load %arg7[%c0_21, %c0_22] : memref<8x10xf32, #tpu.memory_space<vmem>>, vector<8x10xf32>
      tpu.vector_store %arg7[%c0_21, %c0_22], %31 {strides = array<i32>} : memref<8x10xf32, #tpu.memory_space<vmem>>, vector<8x10xf32>,
    } else {
    }
    return
  }
  func.func @transform_0(%arg0: i32, %arg1: i32) -> (i32, i32) {
    %c0_i32 = arith.constant 0 : i32
    %c0_i32_0 = arith.constant 0 : i32
    return %arg0, %c0_i32 : i32, i32
  }
  func.func @transform_1(%arg0: i32, %arg1: i32) -> (i32, i32) {
    %c0_i32 = arith.constant 0 : i32
    %c0_i32_0 = arith.constant 0 : i32
    return %c0_i32, %arg1 : i32, i32
  }
  func.func @transform_2(%arg0: i32, %arg1: i32) -> (i32, i32) {
    %c0_i32 = arith.constant 0 : i32
    %c0_i32_0 = arith.constant 0 : i32
    return %c0_i32, %arg1 : i32, i32
  }
  func.func @transform_3(%arg0: i32, %arg1: i32) -> (i32, i32) {
    %c0_i32 = arith.constant 0 : i32
    %c0_i32_0 = arith.constant 0 : i32
    return %arg1, %c0_i32 : i32, i32
  }
  func.func @transform_4(%arg0: i32, %arg1: i32) -> (i32, i32) {
    %c0_i32 = arith.constant 0 : i32
    %c0_i32_0 = arith.constant 0 : i32
    %c0_i32_1 = arith.constant 0 : i32
    return %c0_i32, %c0_i32_0 : i32, i32
  }
  func.func @transform_5(%arg0: i32, %arg1: i32) -> (i32, i32) {
    %c0_i32 = arith.constant 0 : i32
    %c0_i32_0 = arith.constant 0 : i32
    return %arg0, %c0_i32 : i32, i32
  }
}

</mosaic_0001>

<llo_original>
// kernel: tpu_custom_call.1
$region0: #{tpu_custom_call.1}
  #allocation0 [shape = 'u32[]', space=smem, size = 0x4, offset = 0x4, fixed_abs, tag = 'smem constant byte address 0x4 - core index']
  #allocation1 [shape = 'u32[144,128]{1,0:T(1,128)}', space=vmem, size = 0x12000, scoped, tag = 'internal scratch']
  #allocation2 [shape = 'f32[8,10]{1,0:T(8,128)}', space=vmem, size = 0x1000, scoped, tag = 'scratch operand']
  %s0 = inlined_call_operand.hbm [shape: bf16[8,3072], index: 0, kind: input, shape index: {}]
  %s1 = inlined_call_operand.hbm [shape: bf16[3072,1024], index: 1, kind: input, shape index: {}]
  %s2 = inlined_call_operand.hbm [shape: f32[1,1024], index: 2, kind: input, shape index: {}]
  %s3 = inlined_call_operand.vmem [shape: f32[1024,10], index: 3, kind: input, shape index: {}]
  %s4 = inlined_call_operand.hbm [shape: f32[1,10], index: 4, kind: input, shape index: {}]
  %s5 = inlined_call_operand.hbm [shape: f32[8,10], index: 5, kind: output, shape index: {}]
  %s6 = sld [smem:[#allocation0]]
  $region77: #{tpu_custom_call.1} parent=0
    _
  %s8 = ssub.s32 1, %s6
  %s9 = scalar_select 0, %s8, %s6
  $region1: #{tpu_custom_call.1} parent=0
    #allocation3 [shape = 'u8[49152]{0}', space=vmem, size = 0xc000, scoped, tag = 'input window, operand 0, single buffered']
    #allocation4 [shape = 's32[2]{0}', space=sflag, size = 0x8, scoped, tag = 'scoped memory for tpu_custom_call.1']
    #allocation5 [shape = 's32[2]{0}', space=sflag, size = 0x8, scoped, tag = 'scoped memory for tpu_custom_call.1']
    #allocation6 [shape = 'u8[3145728]{0}', space=vmem, size = 0x300000, scoped, tag = 'input window, operand 1']
    #allocation7 [shape = 's32[2]{0}', space=sflag, size = 0x8, scoped, tag = 'scoped memory for tpu_custom_call.1']
    #allocation8 [shape = 'u8[2048]{0}', space=vmem, size = 0x800, scoped, tag = 'input window, operand 2']
    #allocation9 [shape = 'u8[512]{0}', space=vmem, size = 0x400, scoped, tag = 'input window, operand 4, single buffered']
    #allocation10 [shape = 's32[1]{0}', space=sflag, size = 0x4, scoped, tag = 'scoped memory for tpu_custom_call.1']
    #allocation11 [shape = 'u8[4096]{0}', space=vmem, size = 0x1000, scoped, tag = 'output window, operand 0, single buffered']
    %10 = vsyncpa [#allocation4], 0
    %11 = vsyncpa [#allocation7], 0
    %s12 = scalar_lea.sflag [#allocation7], 1
    %13 = vsyncpa %s12, 0
    %14 = vsyncpa [#allocation10], 0
    %15 = vsyncpa [#allocation5], 0
    loop: start=0, step=1, limit=6
    $region2: #{tpu_custom_call.1} parent=1 // loop_pre_header
      _
    $region3: #{tpu_custom_call.1} parent=1 // loop_header
      %s17 = sphi 0, %s21
      %p18 = scmp.ge.s32.totalorder %s17, 6
      %s24 = sphi 0, %s36
      %s25 = sphi 0, %s32
      %s26 = sphi 0, %s24
      %s27 = sphi 0, %s25
      %s28 = sphi 0, %s26
      %s29 = sphi 0, %s27
      %s39 = sphi 0, %s41
      %s42 = sphi 0, %s39
      %s43 = sphi 0, %s42
      %s59 = sphi 0, %s43
      %s65 = sphi 0, %s67
      %s68 = sphi 0, %s65
      %s69 = sphi 0, %s68
      %s85 = sphi 0, %s69
      %s91 = sphi 0, %s93
      %s94 = sphi 0, %s91
      %s95 = sphi 0, %s94
      %s111 = sphi 0, %s95
      %s117 = sphi 0, %s119
      %s120 = sphi 0, %s117
      %s121 = sphi 0, %s120
      %s137 = sphi 0, %s121
      %s141 = sphi 0, %s141
      %s143 = sphi 0, %s141
      %s144 = sphi 0, %s143
      %s158 = sphi 0, %s144
      %s164 = sphi 0, %s166
      %s167 = sphi 0, %s164
      %s168 = sphi 0, %s167
      %s184 = sphi 0, %s168
    $region4: #{tpu_custom_call.1} parent=1 // loop_header_branch
      %20 = sbr.rel (%p18) target = $region8
    $region5: #{tpu_custom_call.1} parent=1 // loop_body
      %s22 = ssub.s32 %s17, 1
      %s23 = ssub.s32 %s17, 2
      %s30 = sadd.s32 1, %s25
      %p31 = scmp.ge.s32.totalorder %s30, 4
      %s32 = scalar_select %p31, 0, %s30
      %s33 = sadd.s32 1, %s24
      %s34 = scalar_select %p31, %s33, %s24
      %p35 = scmp.ge.s32.totalorder %s34, 1
      %s36 = scalar_select %p35, 0, %s34
      %s37 = ssub.s32 %s24, %s36
      %p38 = scmp.eq.s32.totalorder %s37, 0
      %s40 = sadd.s32 %s39, 1
      %s41 = scalar_select %p38, %s39, %s40
      %p44 = pneg %p38
      %p45 = scmp.eq.s32.totalorder %s17, 3
      %p46 = por %p44, %p45
      %p47 = scmp.ne.s32.totalorder %s39, %s42
      %p48 = scmp.eq.s32.totalorder %s17, 0
      %p49 = por %p47, %p48
      %p50 = scmp.ne.s32.totalorder %s39, %s42
      %p51 = scmp.eq.s32.totalorder %s22, 3
      %p52 = por %p50, %p51
      %p53 = scmp.ne.s32.totalorder %s42, %s43
      %p54 = scmp.eq.s32.totalorder %s22, 0
      %p55 = por %p53, %p54
      %p56 = scmp.ne.s32.totalorder %s42, %s43
      %p57 = scmp.eq.s32.totalorder %s23, 3
      %p58 = por %p56, %p57
      %p60 = scmp.ne.s32.totalorder %s43, %s59
      %p61 = scmp.eq.s32.totalorder %s23, 0
      %p62 = por %p60, %p61
      %s63 = ssub.s32 %s25, %s32
      %p64 = scmp.eq.s32.totalorder %s63, 0
      %s66 = sadd.s32 %s65, 1
      %s67 = scalar_select %p64, %s65, %s66
      %p70 = pneg %p64
      %p71 = scmp.eq.s32.totalorder %s17, 3
      %p72 = por %p70, %p71
      %p73 = scmp.ne.s32.totalorder %s65, %s68
      %p74 = scmp.eq.s32.totalorder %s17, 0
      %p75 = por %p73, %p74
      %p76 = scmp.ne.s32.totalorder %s65, %s68
      %p77 = scmp.eq.s32.totalorder %s22, 3
      %p78 = por %p76, %p77
      %p79 = scmp.ne.s32.totalorder %s68, %s69
      %p80 = scmp.eq.s32.totalorder %s22, 0
      %p81 = por %p79, %p80
      %p82 = scmp.ne.s32.totalorder %s68, %s69
      %p83 = scmp.eq.s32.totalorder %s23, 3
      %p84 = por %p82, %p83
      %p86 = scmp.ne.s32.totalorder %s69, %s85
      %p87 = scmp.eq.s32.totalorder %s23, 0
      %p88 = por %p86, %p87
      %s89 = ssub.s32 %s25, %s32
      %p90 = scmp.eq.s32.totalorder %s89, 0
      %s92 = sadd.s32 %s91, 1
      %s93 = scalar_select %p90, %s91, %s92
      %p96 = pneg %p90
      %p97 = scmp.eq.s32.totalorder %s17, 3
      %p98 = por %p96, %p97
      %p99 = scmp.ne.s32.totalorder %s91, %s94
      %p100 = scmp.eq.s32.totalorder %s17, 0
      %p101 = por %p99, %p100
      %p102 = scmp.ne.s32.totalorder %s91, %s94
      %p103 = scmp.eq.s32.totalorder %s22, 3
      %p104 = por %p102, %p103
      %p105 = scmp.ne.s32.totalorder %s94, %s95
      %p106 = scmp.eq.s32.totalorder %s22, 0
      %p107 = por %p105, %p106
      %p108 = scmp.ne.s32.totalorder %s94, %s95
      %p109 = scmp.eq.s32.totalorder %s23, 3
      %p110 = por %p108, %p109
      %p112 = scmp.ne.s32.totalorder %s95, %s111
      %p113 = scmp.eq.s32.totalorder %s23, 0
      %p114 = por %p112, %p113
      %s115 = ssub.s32 %s25, %s32
      %p116 = scmp.eq.s32.totalorder %s115, 0
      %s118 = sadd.s32 %s117, 1
      %s119 = scalar_select %p116, %s117, %s118
      %p122 = pneg %p116
      %p123 = scmp.eq.s32.totalorder %s17, 3
      %p124 = por %p122, %p123
      %p125 = scmp.ne.s32.totalorder %s117, %s120
      %p126 = scmp.eq.s32.totalorder %s17, 0
      %p127 = por %p125, %p126
      %p128 = scmp.ne.s32.totalorder %s117, %s120
      %p129 = scmp.eq.s32.totalorder %s22, 3
      %p130 = por %p128, %p129
      %p131 = scmp.ne.s32.totalorder %s120, %s121
      %p132 = scmp.eq.s32.totalorder %s22, 0
      %p133 = por %p131, %p132
      %p134 = scmp.ne.s32.totalorder %s120, %s121
      %p135 = scmp.eq.s32.totalorder %s23, 3
      %p136 = por %p134, %p135
      %p138 = scmp.ne.s32.totalorder %s121, %s137
      %p139 = scmp.eq.s32.totalorder %s23, 0
      %p140 = por %p138, %p139
      %s142 = sadd.s32 %s141, 1
      %p145 = scmp.eq.s32.totalorder %s17, 3
      %p146 = scmp.ne.s32.totalorder %s141, %s143
      %p147 = scmp.eq.s32.totalorder %s17, 0
      %p148 = por %p146, %p147
      %p149 = scmp.ne.s32.totalorder %s141, %s143
      %p150 = scmp.eq.s32.totalorder %s22, 3
      %p151 = por %p149, %p150
      %p152 = scmp.ne.s32.totalorder %s143, %s144
      %p153 = scmp.eq.s32.totalorder %s22, 0
      %p154 = por %p152, %p153
      %p155 = scmp.ne.s32.totalorder %s143, %s144
      %p156 = scmp.eq.s32.totalorder %s23, 3
      %p157 = por %p155, %p156
      %p159 = scmp.ne.s32.totalorder %s144, %s158
      %p160 = scmp.eq.s32.totalorder %s23, 0
      %p161 = por %p159, %p160
      %s162 = ssub.s32 %s24, %s36
      %p163 = scmp.eq.s32.totalorder %s162, 0
      %s165 = sadd.s32 %s164, 1
      %s166 = scalar_select %p163, %s164, %s165
      %p169 = pneg %p163
      %p170 = scmp.eq.s32.totalorder %s17, 3
      %p171 = por %p169, %p170
      %p172 = scmp.ne.s32.totalorder %s164, %s167
      %p173 = scmp.eq.s32.totalorder %s17, 0
      %p174 = por %p172, %p173
      %p175 = scmp.ne.s32.totalorder %s164, %s167
      %p176 = scmp.eq.s32.totalorder %s22, 3
      %p177 = por %p175, %p176
      %p178 = scmp.ne.s32.totalorder %s167, %s168
      %p179 = scmp.eq.s32.totalorder %s22, 0
      %p180 = por %p178, %p179
      %p181 = scmp.ne.s32.totalorder %s167, %s168
      %p182 = scmp.eq.s32.totalorder %s23, 3
      %p183 = por %p181, %p182
      %p185 = scmp.ne.s32.totalorder %s168, %s184
      %p186 = scmp.eq.s32.totalorder %s23, 0
      %p187 = por %p185, %p186
      %p188 = scmp.le.s32.totalorder 1, %s17
      %p189 = scmp.lt.s32.totalorder %s17, 5
      %p190 = pnand %p188, %p189
      %p191 = pneg %p190
      // Predicated region
      $region9: #{tpu_custom_call.1} parent=5 // pred_check
        _
      $region10: #{tpu_custom_call.1} parent=5 // pred_check_branch
        %193 = sbr.rel (%p190) target = $region12
      $region11: #{tpu_custom_call.1} parent=5 // pred_region
        %s194 = ssub.s32 %s17, 1
        // Predicated region
        $region13: #{tpu_custom_call.1} parent=11 // pred_check
          %p195 = pneg %p55
        $region14: #{tpu_custom_call.1} parent=11 // pred_check_branch
          %197 = sbr.rel (%p195) target = $region16
        $region15: #{tpu_custom_call.1} parent=11 // pred_region
          %s199 = ssub.s32 1536, 1536
          %200 = vsyncadd [#allocation4], %s199
          %s201 = smul.addr %s26, 24
          %s202 = smul.addr %s201, 64
          %s203 = scalar_lea.hbm %s0, %s202
          %s205 = sshll.u32 [#allocation3], 4
          %s206 = int_to_ptr.vmem [resolvable:$true] %s205
          %208 = dma.hbm_to_vmem [thread:$0]  %s203, 1536, %s206, [#allocation4]
        $region16: #{tpu_custom_call.1} parent=11 // pred_fallthru
          _
        // Predicated region
        $region17: #{tpu_custom_call.1} parent=11 // pred_check
          %p209 = pneg %p154
        $region18: #{tpu_custom_call.1} parent=11 // pred_check_branch
          %211 = sbr.rel (%p209) target = $region20
        $region19: #{tpu_custom_call.1} parent=11 // pred_region
          %s213 = ssub.s32 16, 16
          %214 = vsyncadd [#allocation10], %s213
          %s216 = sshll.u32 [#allocation9], 4
          %s217 = int_to_ptr.vmem [resolvable:$true] %s216
          %219 = dma.hbm_to_vmem [thread:$0]  %s4, 16, %s217, [#allocation10]
        $region20: #{tpu_custom_call.1} parent=11 // pred_fallthru
          _
      $region12: #{tpu_custom_call.1} parent=5 // pred_fallthru
        _
      %p220 = scmp.lt.s32.totalorder %s17, 4
      // Predicated region
      $region21: #{tpu_custom_call.1} parent=5 // pred_check
        %p221 = pneg %p220
      $region22: #{tpu_custom_call.1} parent=5 // pred_check_branch
        %223 = sbr.rel (%p221) target = $region24
      $region23: #{tpu_custom_call.1} parent=5 // pred_region
        // Predicated region
        $region25: #{tpu_custom_call.1} parent=23 // pred_check
          %p224 = pneg %p75
        $region26: #{tpu_custom_call.1} parent=23 // pred_check_branch
          %226 = sbr.rel (%p224) target = $region28
        $region27: #{tpu_custom_call.1} parent=23 // pred_region
          %s227 = sand.u32 %s17, 1
          %s228 = scalar_lea.sflag [#allocation7], %s227
          %s229 = sand.u32 %s65, 1
          %s230 = smul.addr %s229, 3072
          %s231 = scalar_lea.vmem [#allocation6], %s230
          %s232 = smul.u32 2, %s25
          %s234 = ssub.s32 49152, 49152
          %235 = vsyncadd %s228, %s234
          %s236 = smul.addr %s232, 64
          %s237 = scalar_lea.hbm %s1, %s236
          %s238 = sshll.u32 %s231, 4
          %s239 = int_to_ptr.vmem [resolvable:$true] %s238
          %244 = dma.hbm_to_vmem [thread:$0]  %s237, 49152, %s239, %s228, 512, 128, 8
        $region28: #{tpu_custom_call.1} parent=23 // pred_fallthru
          _
        // Predicated region
        $region29: #{tpu_custom_call.1} parent=23 // pred_check
          %p245 = pneg %p101
        $region30: #{tpu_custom_call.1} parent=23 // pred_check_branch
          %247 = sbr.rel (%p245) target = $region32
        $region31: #{tpu_custom_call.1} parent=23 // pred_region
          %s248 = sand.u32 %s17, 1
          %s249 = scalar_lea.sflag [#allocation7], %s248
          %s250 = sand.u32 %s91, 1
          %s251 = smul.addr %s250, 2
          %s252 = scalar_lea.vmem [#allocation8], %s251
          %s253 = smul.u32 2, %s25
          %s255 = ssub.s32 32, 32
          %256 = vsyncadd %s249, %s255
          %s257 = smul.addr %s253, 16
          %s258 = scalar_lea.hbm %s2, %s257
          %s260 = sshll.u32 %s252, 4
          %s261 = int_to_ptr.vmem [resolvable:$true] %s260
          %263 = dma.hbm_to_vmem [thread:$0]  %s258, 32, %s261, %s249
        $region32: #{tpu_custom_call.1} parent=23 // pred_fallthru
          _
        // Predicated region
        $region33: #{tpu_custom_call.1} parent=23 // pred_check
          %p264 = pneg %p127
        $region34: #{tpu_custom_call.1} parent=23 // pred_check_branch
          %266 = sbr.rel (%p264) target = $region36
        $region35: #{tpu_custom_call.1} parent=23 // pred_region
          %s267 = smul.u32 32, %s25
          %p268 = scmp.lt.s32.totalorder %s267, 127
          %s269 = scalar_select %p268, %s267, 127
          %s270 = smul.addr %s269, 8
          %s271 = scalar_lea.vmem %s3, %s270
          %s272 = smul.u32 32, %s25
        $region36: #{tpu_custom_call.1} parent=23 // pred_fallthru
          _
      $region24: #{tpu_custom_call.1} parent=5 // pred_fallthru
        _
      %p273 = scmp.le.s32.totalorder 1, %s17
      %p274 = scmp.lt.s32.totalorder %s17, 5
      %p275 = pnand %p273, %p274
      %p276 = pneg %p275
      // Predicated region
      $region37: #{tpu_custom_call.1} parent=5 // pred_check
        _
      $region38: #{tpu_custom_call.1} parent=5 // pred_check_branch
        %278 = sbr.rel (%p275) target = $region40
      $region39: #{tpu_custom_call.1} parent=5 // pred_region
        %s279 = ssub.s32 %s17, 1
        // Predicated region
        $region41: #{tpu_custom_call.1} parent=39 // pred_check
          %p280 = pneg %p55
        $region42: #{tpu_custom_call.1} parent=39 // pred_check_branch
          %282 = sbr.rel (%p280) target = $region44
        $region43: #{tpu_custom_call.1} parent=39 // pred_region
          %283 = dma.done [#allocation4], 1536
        $region44: #{tpu_custom_call.1} parent=39 // pred_fallthru
          _
        %s284 = sand.u32 %s22, 1
        %s285 = scalar_lea.sflag [#allocation7], %s284
        %s286 = sand.u32 %s68, 1
        %s287 = smul.addr %s286, 3072
        %s288 = scalar_lea.vmem [#allocation6], %s287
        // Predicated region
        $region45: #{tpu_custom_call.1} parent=39 // pred_check
          %p289 = pneg %p81
        $region46: #{tpu_custom_call.1} parent=39 // pred_check_branch
          %291 = sbr.rel (%p289) target = $region48
        $region47: #{tpu_custom_call.1} parent=39 // pred_region
          %292 = dma.done %s285, 49152
        $region48: #{tpu_custom_call.1} parent=39 // pred_fallthru
          _
        %s293 = sand.u32 %s22, 1
        %s294 = scalar_lea.sflag [#allocation7], %s293
        %s295 = sand.u32 %s94, 1
        %s296 = smul.addr %s295, 2
        %s297 = scalar_lea.vmem [#allocation8], %s296
        // Predicated region
        $region49: #{tpu_custom_call.1} parent=39 // pred_check
          %p298 = pneg %p107
        $region50: #{tpu_custom_call.1} parent=39 // pred_check_branch
          %300 = sbr.rel (%p298) target = $region52
        $region51: #{tpu_custom_call.1} parent=39 // pred_region
          %301 = dma.done %s294, 32
        $region52: #{tpu_custom_call.1} parent=39 // pred_fallthru
          _
        // Predicated region
        $region53: #{tpu_custom_call.1} parent=39 // pred_check
          %p302 = pneg %p154
        $region54: #{tpu_custom_call.1} parent=39 // pred_check_branch
          %304 = sbr.rel (%p302) target = $region56
        $region55: #{tpu_custom_call.1} parent=39 // pred_region
          %305 = dma.done [#allocation10], 16
        $region56: #{tpu_custom_call.1} parent=39 // pred_fallthru
          _
        %p306 = pneg %p55
        %p307 = pneg %p52
        %s308 = sand.u32 %s22, 1
        %s309 = scalar_lea.sflag [#allocation7], %s308
        %s310 = sand.u32 %s68, 1
        %s311 = smul.addr %s310, 3072
        %s312 = scalar_lea.vmem [#allocation6], %s311
        %p313 = pneg %p81
        %p314 = pneg %p78
        %s315 = sand.u32 %s22, 1
        %s316 = scalar_lea.sflag [#allocation7], %s315
        %s317 = sand.u32 %s94, 1
        %s318 = smul.addr %s317, 2
        %s319 = scalar_lea.vmem [#allocation8], %s318
        %p320 = pneg %p107
        %p321 = pneg %p104
        %s322 = smul.u32 32, %s27
        %p323 = scmp.lt.s32.totalorder %s322, 127
        %s324 = scalar_select %p323, %s322, 127
        %s325 = smul.addr %s324, 8
        %s326 = scalar_lea.vmem %s3, %s325
        %p327 = pneg %p133
        %p328 = pneg %p130
        %p329 = pneg %p154
        %p330 = pneg %p151
        %p331 = pneg %p180
        %p332 = pneg %p177
        %s333 = smul.u32 2, %s27
        %s334 = smul.u32 2, %s27
        %s335 = smul.u32 32, %s27
        %p336 = scmp.lt.s32.totalorder %s335, 127
        %s337 = scalar_select %p336, %s335, 127
        %s338 = smul.addr %s337, 8
        %s339 = scalar_lea.vmem %s3, %s338
        %s340 = smul.u32 32, %s27
        %p341 = scmp.eq.s32.totalorder %s27, 0
        // Predicated region
        $region57: #{tpu_custom_call.1} parent=39 // pred_check
          %p342 = pneg %p341
        $region58: #{tpu_custom_call.1} parent=39 // pred_check_branch
          %344 = sbr.rel (%p342) target = $region60
        $region59: #{tpu_custom_call.1} parent=39 // pred_region
          %vm345 = vcmask 80896
          %346 = vst.msk [vmem:[#allocation2] sm:$0xff] %vm345, 0.0
        $region60: #{tpu_custom_call.1} parent=39 // pred_fallthru
          _
        %v347 = vld [vmem:[#allocation3] sm:$0xff]
        %v348 = vld [vmem:[#allocation3 + $0x8] sm:$0xff]
        %v349 = vld [vmem:[#allocation3 + $0x10] sm:$0xff]
        %v350 = vld [vmem:[#allocation3 + $0x18] sm:$0xff]
        %v351 = vld [vmem:[#allocation3 + $0x20] sm:$0xff]
        %v352 = vld [vmem:[#allocation3 + $0x28] sm:$0xff]
        %v353 = vld [vmem:[#allocation3 + $0x30] sm:$0xff]
        %v354 = vld [vmem:[#allocation3 + $0x38] sm:$0xff]
        %v355 = vld [vmem:[#allocation3 + $0x40] sm:$0xff]
        %v356 = vld [vmem:[#allocation3 + $0x48] sm:$0xff]
        %v357 = vld [vmem:[#allocation3 + $0x50] sm:$0xff]
        %v358 = vld [vmem:[#allocation3 + $0x58] sm:$0xff]
        %v359 = vld [vmem:[%s288] sm:$0xff]
        %v360 = vld [vmem:[%s288 + $0x8] sm:$0xff]
        %v361 = vld [vmem:[%s288 + $0x10] sm:$0xff]
        %v362 = vld [vmem:[%s288 + $0x18] sm:$0xff]
        %v363 = vld [vmem:[%s288 + $0x20] sm:$0xff]
        %v364 = vld [vmem:[%s288 + $0x28] sm:$0xff]
        %v365 = vld [vmem:[%s288 + $0x30] sm:$0xff]
        %v366 = vld [vmem:[%s288 + $0x38] sm:$0xff]
        %v367 = vld [vmem:[%s288 + $0x40] sm:$0xff]
        %v368 = vld [vmem:[%s288 + $0x48] sm:$0xff]
        %v369 = vld [vmem:[%s288 + $0x50] sm:$0xff]
        %v370 = vld [vmem:[%s288 + $0x58] sm:$0xff]
        %v371 = vld [vmem:[%s288 + $0x60] sm:$0xff]
        %v372 = vld [vmem:[%s288 + $0x68] sm:$0xff]
        %v373 = vld [vmem:[%s288 + $0x70] sm:$0xff]
        %v374 = vld [vmem:[%s288 + $0x78] sm:$0xff]
        %v375 = vld [vmem:[%s288 + $0x80] sm:$0xff]
        %v376 = vld [vmem:[%s288 + $0x88] sm:$0xff]
        %v377 = vld [vmem:[%s288 + $0x90] sm:$0xff]
        %v378 = vld [vmem:[%s288 + $0x98] sm:$0xff]
        %v379 = vld [vmem:[%s288 + $0xa0] sm:$0xff]
        %v380 = vld [vmem:[%s288 + $0xa8] sm:$0xff]
        %v381 = vld [vmem:[%s288 + $0xb0] sm:$0xff]
        %v382 = vld [vmem:[%s288 + $0xb8] sm:$0xff]
        %v383 = vld [vmem:[%s288 + $0xc0] sm:$0xff]
        %v384 = vld [vmem:[%s288 + $0xc8] sm:$0xff]
        %v385 = vld [vmem:[%s288 + $0xd0] sm:$0xff]
        %v386 = vld [vmem:[%s288 + $0xd8] sm:$0xff]
        %v387 = vld [vmem:[%s288 + $0xe0] sm:$0xff]
        %v388 = vld [vmem:[%s288 + $0xe8] sm:$0xff]
        %v389 = vld [vmem:[%s288 + $0xf0] sm:$0xff]
        %v390 = vld [vmem:[%s288 + $0xf8] sm:$0xff]
        %v391 = vld [vmem:[%s288 + $0x100] sm:$0xff]
        %v392 = vld [vmem:[%s288 + $0x108] sm:$0xff]
        %v393 = vld [vmem:[%s288 + $0x110] sm:$0xff]
        %v394 = vld [vmem:[%s288 + $0x118] sm:$0xff]
        %v395 = vld [vmem:[%s288 + $0x120] sm:$0xff]
        %v396 = vld [vmem:[%s288 + $0x128] sm:$0xff]
        %v397 = vld [vmem:[%s288 + $0x130] sm:$0xff]
        %v398 = vld [vmem:[%s288 + $0x138] sm:$0xff]
        %v399 = vld [vmem:[%s288 + $0x140] sm:$0xff]
        %v400 = vld [vmem:[%s288 + $0x148] sm:$0xff]
        %v401 = vld [vmem:[%s288 + $0x150] sm:$0xff]
        %v402 = vld [vmem:[%s288 + $0x158] sm:$0xff]
        %v403 = vld [vmem:[%s288 + $0x160] sm:$0xff]
        %v404 = vld [vmem:[%s288 + $0x168] sm:$0xff]
        %v405 = vld [vmem:[%s288 + $0x170] sm:$0xff]
        %v406 = vld [vmem:[%s288 + $0x178] sm:$0xff]
        %v407 = vld [vmem:[%s288 + $0x180] sm:$0xff]
        %v408 = vld [vmem:[%s288 + $0x188] sm:$0xff]
        %v409 = vld [vmem:[%s288 + $0x190] sm:$0xff]
        %v410 = vld [vmem:[%s288 + $0x198] sm:$0xff]
        %v411 = vld [vmem:[%s288 + $0x1a0] sm:$0xff]
        %v412 = vld [vmem:[%s288 + $0x1a8] sm:$0xff]
        %v413 = vld [vmem:[%s288 + $0x1b0] sm:$0xff]
        %v414 = vld [vmem:[%s288 + $0x1b8] sm:$0xff]
        %v415 = vld [vmem:[%s288 + $0x1c0] sm:$0xff]
        %v416 = vld [vmem:[%s288 + $0x1c8] sm:$0xff]
        %v417 = vld [vmem:[%s288 + $0x1d0] sm:$0xff]
        %v418 = vld [vmem:[%s288 + $0x1d8] sm:$0xff]
        %v419 = vld [vmem:[%s288 + $0x1e0] sm:$0xff]
        %v420 = vld [vmem:[%s288 + $0x1e8] sm:$0xff]
        %v421 = vld [vmem:[%s288 + $0x1f0] sm:$0xff]
        %v422 = vld [vmem:[%s288 + $0x1f8] sm:$0xff]
        %v423 = vld [vmem:[%s288 + $0x200] sm:$0xff]
        %v424 = vld [vmem:[%s288 + $0x208] sm:$0xff]
        %v425 = vld [vmem:[%s288 + $0x210] sm:$0xff]
        %v426 = vld [vmem:[%s288 + $0x218] sm:$0xff]
        %v427 = vld [vmem:[%s288 + $0x220] sm:$0xff]
        %v428 = vld [vmem:[%s288 + $0x228] sm:$0xff]
        %v429 = vld [vmem:[%s288 + $0x230] sm:$0xff]
        %v430 = vld [vmem:[%s288 + $0x238] sm:$0xff]
        %v431 = vld [vmem:[%s288 + $0x240] sm:$0xff]
        %v432 = vld [vmem:[%s288 + $0x248] sm:$0xff]
        %v433 = vld [vmem:[%s288 + $0x250] sm:$0xff]
        %v434 = vld [vmem:[%s288 + $0x258] sm:$0xff]
        %v435 = vld [vmem:[%s288 + $0x260] sm:$0xff]
        %v436 = vld [vmem:[%s288 + $0x268] sm:$0xff]
        %v437 = vld [vmem:[%s288 + $0x270] sm:$0xff]
        %v438 = vld [vmem:[%s288 + $0x278] sm:$0xff]
        %v439 = vld [vmem:[%s288 + $0x280] sm:$0xff]
        %v440 = vld [vmem:[%s288 + $0x288] sm:$0xff]
        %v441 = vld [vmem:[%s288 + $0x290] sm:$0xff]
        %v442 = vld [vmem:[%s288 + $0x298] sm:$0xff]
        %v443 = vld [vmem:[%s288 + $0x2a0] sm:$0xff]
        %v444 = vld [vmem:[%s288 + $0x2a8] sm:$0xff]
        %v445 = vld [vmem:[%s288 + $0x2b0] sm:$0xff]
        %v446 = vld [vmem:[%s288 + $0x2b8] sm:$0xff]
        %v447 = vld [vmem:[%s288 + $0x2c0] sm:$0xff]
        %v448 = vld [vmem:[%s288 + $0x2c8] sm:$0xff]
        %v449 = vld [vmem:[%s288 + $0x2d0] sm:$0xff]
        %v450 = vld [vmem:[%s288 + $0x2d8] sm:$0xff]
        %v451 = vld [vmem:[%s288 + $0x2e0] sm:$0xff]
        %v452 = vld [vmem:[%s288 + $0x2e8] sm:$0xff]
        %v453 = vld [vmem:[%s288 + $0x2f0] sm:$0xff]
        %v454 = vld [vmem:[%s288 + $0x2f8] sm:$0xff]
        %v455 = vld [vmem:[%s288 + $0x300] sm:$0xff]
        %v456 = vld [vmem:[%s288 + $0x308] sm:$0xff]
        %v457 = vld [vmem:[%s288 + $0x310] sm:$0xff]
        %v458 = vld [vmem:[%s288 + $0x318] sm:$0xff]
        %v459 = vld [vmem:[%s288 + $0x320] sm:$0xff]
        %v460 = vld [vmem:[%s288 + $0x328] sm:$0xff]
        %v461 = vld [vmem:[%s288 + $0x330] sm:$0xff]
        %v462 = vld [vmem:[%s288 + $0x338] sm:$0xff]
        %v463 = vld [vmem:[%s288 + $0x340] sm:$0xff]
        %v464 = vld [vmem:[%s288 + $0x348] sm:$0xff]
        %v465 = vld [vmem:[%s288 + $0x350] sm:$0xff]
        %v466 = vld [vmem:[%s288 + $0x358] sm:$0xff]
        %v467 = vld [vmem:[%s288 + $0x360] sm:$0xff]
        %v468 = vld [vmem:[%s288 + $0x368] sm:$0xff]
        %v469 = vld [vmem:[%s288 + $0x370] sm:$0xff]
        %v470 = vld [vmem:[%s288 + $0x378] sm:$0xff]
        %v471 = vld [vmem:[%s288 + $0x380] sm:$0xff]
        %v472 = vld [vmem:[%s288 + $0x388] sm:$0xff]
        %v473 = vld [vmem:[%s288 + $0x390] sm:$0xff]
        %v474 = vld [vmem:[%s288 + $0x398] sm:$0xff]
        %v475 = vld [vmem:[%s288 + $0x3a0] sm:$0xff]
        %v476 = vld [vmem:[%s288 + $0x3a8] sm:$0xff]
        %v477 = vld [vmem:[%s288 + $0x3b0] sm:$0xff]
        %v478 = vld [vmem:[%s288 + $0x3b8] sm:$0xff]
        %v479 = vld [vmem:[%s288 + $0x3c0] sm:$0xff]
        %v480 = vld [vmem:[%s288 + $0x3c8] sm:$0xff]
        %v481 = vld [vmem:[%s288 + $0x3d0] sm:$0xff]
        %v482 = vld [vmem:[%s288 + $0x3d8] sm:$0xff]
        %v483 = vld [vmem:[%s288 + $0x3e0] sm:$0xff]
        %v484 = vld [vmem:[%s288 + $0x3e8] sm:$0xff]
        %v485 = vld [vmem:[%s288 + $0x3f0] sm:$0xff]
        %v486 = vld [vmem:[%s288 + $0x3f8] sm:$0xff]
        %v487 = vld [vmem:[%s288 + $0x400] sm:$0xff]
        %v488 = vld [vmem:[%s288 + $0x408] sm:$0xff]
        %v489 = vld [vmem:[%s288 + $0x410] sm:$0xff]
        %v490 = vld [vmem:[%s288 + $0x418] sm:$0xff]
        %v491 = vld [vmem:[%s288 + $0x420] sm:$0xff]
        %v492 = vld [vmem:[%s288 + $0x428] sm:$0xff]
        %v493 = vld [vmem:[%s288 + $0x430] sm:$0xff]
        %v494 = vld [vmem:[%s288 + $0x438] sm:$0xff]
        %v495 = vld [vmem:[%s288 + $0x440] sm:$0xff]
        %v496 = vld [vmem:[%s288 + $0x448] sm:$0xff]
        %v497 = vld [vmem:[%s288 + $0x450] sm:$0xff]
        %v498 = vld [vmem:[%s288 + $0x458] sm:$0xff]
        %v499 = vld [vmem:[%s288 + $0x460] sm:$0xff]
        %v500 = vld [vmem:[%s288 + $0x468] sm:$0xff]
        %v501 = vld [vmem:[%s288 + $0x470] sm:$0xff]
        %v502 = vld [vmem:[%s288 + $0x478] sm:$0xff]
        %v503 = vld [vmem:[%s288 + $0x480] sm:$0xff]
        %v504 = vld [vmem:[%s288 + $0x488] sm:$0xff]
        %v505 = vld [vmem:[%s288 + $0x490] sm:$0xff]
        %v506 = vld [vmem:[%s288 + $0x498] sm:$0xff]
        %v507 = vld [vmem:[%s288 + $0x4a0] sm:$0xff]
        %v508 = vld [vmem:[%s288 + $0x4a8] sm:$0xff]
        %v509 = vld [vmem:[%s288 + $0x4b0] sm:$0xff]
        %v510 = vld [vmem:[%s288 + $0x4b8] sm:$0xff]
        %v511 = vld [vmem:[%s288 + $0x4c0] sm:$0xff]
        %v512 = vld [vmem:[%s288 + $0x4c8] sm:$0xff]
        %v513 = vld [vmem:[%s288 + $0x4d0] sm:$0xff]
        %v514 = vld [vmem:[%s288 + $0x4d8] sm:$0xff]
        %v515 = vld [vmem:[%s288 + $0x4e0] sm:$0xff]
        %v516 = vld [vmem:[%s288 + $0x4e8] sm:$0xff]
        %v517 = vld [vmem:[%s288 + $0x4f0] sm:$0xff]
        %v518 = vld [vmem:[%s288 + $0x4f8] sm:$0xff]
        %v519 = vld [vmem:[%s288 + $0x500] sm:$0xff]
        %v520 = vld [vmem:[%s288 + $0x508] sm:$0xff]
        %v521 = vld [vmem:[%s288 + $0x510] sm:$0xff]
        %v522 = vld [vmem:[%s288 + $0x518] sm:$0xff]
        %v523 = vld [vmem:[%s288 + $0x520] sm:$0xff]
        %v524 = vld [vmem:[%s288 + $0x528] sm:$0xff]
        %v525 = vld [vmem:[%s288 + $0x530] sm:$0xff]
        %v526 = vld [vmem:[%s288 + $0x538] sm:$0xff]
        %v527 = vld [vmem:[%s288 + $0x540] sm:$0xff]
        %v528 = vld [vmem:[%s288 + $0x548] sm:$0xff]
        %v529 = vld [vmem:[%s288 + $0x550] sm:$0xff]
        %v530 = vld [vmem:[%s288 + $0x558] sm:$0xff]
        %v531 = vld [vmem:[%s288 + $0x560] sm:$0xff]
        %v532 = vld [vmem:[%s288 + $0x568] sm:$0xff]
        %v533 = vld [vmem:[%s288 + $0x570] sm:$0xff]
        %v534 = vld [vmem:[%s288 + $0x578] sm:$0xff]
        %v535 = vld [vmem:[%s288 + $0x580] sm:$0xff]
        %v536 = vld [vmem:[%s288 + $0x588] sm:$0xff]
        %v537 = vld [vmem:[%s288 + $0x590] sm:$0xff]
        %v538 = vld [vmem:[%s288 + $0x598] sm:$0xff]
        %v539 = vld [vmem:[%s288 + $0x5a0] sm:$0xff]
        %v540 = vld [vmem:[%s288 + $0x5a8] sm:$0xff]
        %v541 = vld [vmem:[%s288 + $0x5b0] sm:$0xff]
        %v542 = vld [vmem:[%s288 + $0x5b8] sm:$0xff]
        %v543 = vld [vmem:[%s288 + $0x5c0] sm:$0xff]
        %v544 = vld [vmem:[%s288 + $0x5c8] sm:$0xff]
        %v545 = vld [vmem:[%s288 + $0x5d0] sm:$0xff]
        %v546 = vld [vmem:[%s288 + $0x5d8] sm:$0xff]
        %v547 = vld [vmem:[%s288 + $0x5e0] sm:$0xff]
        %v548 = vld [vmem:[%s288 + $0x5e8] sm:$0xff]
        %v549 = vld [vmem:[%s288 + $0x5f0] sm:$0xff]
        %v550 = vld [vmem:[%s288 + $0x5f8] sm:$0xff]
        %v551 = vld [vmem:[%s288 + $0x600] sm:$0xff]
        %v552 = vld [vmem:[%s288 + $0x608] sm:$0xff]
        %v553 = vld [vmem:[%s288 + $0x610] sm:$0xff]
        %v554 = vld [vmem:[%s288 + $0x618] sm:$0xff]
        %v555 = vld [vmem:[%s288 + $0x620] sm:$0xff]
        %v556 = vld [vmem:[%s288 + $0x628] sm:$0xff]
        %v557 = vld [vmem:[%s288 + $0x630] sm:$0xff]
        %v558 = vld [vmem:[%s288 + $0x638] sm:$0xff]
        %v559 = vld [vmem:[%s288 + $0x640] sm:$0xff]
        %v560 = vld [vmem:[%s288 + $0x648] sm:$0xff]
        %v561 = vld [vmem:[%s288 + $0x650] sm:$0xff]
        %v562 = vld [vmem:[%s288 + $0x658] sm:$0xff]
        %v563 = vld [vmem:[%s288 + $0x660] sm:$0xff]
        %v564 = vld [vmem:[%s288 + $0x668] sm:$0xff]
        %v565 = vld [vmem:[%s288 + $0x670] sm:$0xff]
        %v566 = vld [vmem:[%s288 + $0x678] sm:$0xff]
        %v567 = vld [vmem:[%s288 + $0x680] sm:$0xff]
        %v568 = vld [vmem:[%s288 + $0x688] sm:$0xff]
        %v569 = vld [vmem:[%s288 + $0x690] sm:$0xff]
        %v570 = vld [vmem:[%s288 + $0x698] sm:$0xff]
        %v571 = vld [vmem:[%s288 + $0x6a0] sm:$0xff]
        %v572 = vld [vmem:[%s288 + $0x6a8] sm:$0xff]
        %v573 = vld [vmem:[%s288 + $0x6b0] sm:$0xff]
        %v574 = vld [vmem:[%s288 + $0x6b8] sm:$0xff]
        %v575 = vld [vmem:[%s288 + $0x6c0] sm:$0xff]
        %v576 = vld [vmem:[%s288 + $0x6c8] sm:$0xff]
        %v577 = vld [vmem:[%s288 + $0x6d0] sm:$0xff]
        %v578 = vld [vmem:[%s288 + $0x6d8] sm:$0xff]
        %v579 = vld [vmem:[%s288 + $0x6e0] sm:$0xff]
        %v580 = vld [vmem:[%s288 + $0x6e8] sm:$0xff]
        %v581 = vld [vmem:[%s288 + $0x6f0] sm:$0xff]
        %v582 = vld [vmem:[%s288 + $0x6f8] sm:$0xff]
        %v583 = vld [vmem:[%s288 + $0x700] sm:$0xff]
        %v584 = vld [vmem:[%s288 + $0x708] sm:$0xff]
        %v585 = vld [vmem:[%s288 + $0x710] sm:$0xff]
        %v586 = vld [vmem:[%s288 + $0x718] sm:$0xff]
        %v587 = vld [vmem:[%s288 + $0x720] sm:$0xff]
        %v588 = vld [vmem:[%s288 + $0x728] sm:$0xff]
        %v589 = vld [vmem:[%s288 + $0x730] sm:$0xff]
        %v590 = vld [vmem:[%s288 + $0x738] sm:$0xff]
        %v591 = vld [vmem:[%s288 + $0x740] sm:$0xff]
        %v592 = vld [vmem:[%s288 + $0x748] sm:$0xff]
        %v593 = vld [vmem:[%s288 + $0x750] sm:$0xff]
        %v594 = vld [vmem:[%s288 + $0x758] sm:$0xff]
        %v595 = vld [vmem:[%s288 + $0x760] sm:$0xff]
        %v596 = vld [vmem:[%s288 + $0x768] sm:$0xff]
        %v597 = vld [vmem:[%s288 + $0x770] sm:$0xff]
        %v598 = vld [vmem:[%s288 + $0x778] sm:$0xff]
        %v599 = vld [vmem:[%s288 + $0x780] sm:$0xff]
        %v600 = vld [vmem:[%s288 + $0x788] sm:$0xff]
        %v601 = vld [vmem:[%s288 + $0x790] sm:$0xff]
        %v602 = vld [vmem:[%s288 + $0x798] sm:$0xff]
        %v603 = vld [vmem:[%s288 + $0x7a0] sm:$0xff]
        %v604 = vld [vmem:[%s288 + $0x7a8] sm:$0xff]
        %v605 = vld [vmem:[%s288 + $0x7b0] sm:$0xff]
        %v606 = vld [vmem:[%s288 + $0x7b8] sm:$0xff]
        %v607 = vld [vmem:[%s288 + $0x7c0] sm:$0xff]
        %v608 = vld [vmem:[%s288 + $0x7c8] sm:$0xff]
        %v609 = vld [vmem:[%s288 + $0x7d0] sm:$0xff]
        %v610 = vld [vmem:[%s288 + $0x7d8] sm:$0xff]
        %v611 = vld [vmem:[%s288 + $0x7e0] sm:$0xff]
        %v612 = vld [vmem:[%s288 + $0x7e8] sm:$0xff]
        %v613 = vld [vmem:[%s288 + $0x7f0] sm:$0xff]
        %v614 = vld [vmem:[%s288 + $0x7f8] sm:$0xff]
        %v615 = vld [vmem:[%s288 + $0x800] sm:$0xff]
        %v616 = vld [vmem:[%s288 + $0x808] sm:$0xff]
        %v617 = vld [vmem:[%s288 + $0x810] sm:$0xff]
        %v618 = vld [vmem:[%s288 + $0x818] sm:$0xff]
        %v619 = vld [vmem:[%s288 + $0x820] sm:$0xff]
        %v620 = vld [vmem:[%s288 + $0x828] sm:$0xff]
        %v621 = vld [vmem:[%s288 + $0x830] sm:$0xff]
        %v622 = vld [vmem:[%s288 + $0x838] sm:$0xff]
        %v623 = vld [vmem:[%s288 + $0x840] sm:$0xff]
        %v624 = vld [vmem:[%s288 + $0x848] sm:$0xff]
        %v625 = vld [vmem:[%s288 + $0x850] sm:$0xff]
        %v626 = vld [vmem:[%s288 + $0x858] sm:$0xff]
        %v627 = vld [vmem:[%s288 + $0x860] sm:$0xff]
        %v628 = vld [vmem:[%s288 + $0x868] sm:$0xff]
        %v629 = vld [vmem:[%s288 + $0x870] sm:$0xff]
        %v630 = vld [vmem:[%s288 + $0x878] sm:$0xff]
        %v631 = vld [vmem:[%s288 + $0x880] sm:$0xff]
        %v632 = vld [vmem:[%s288 + $0x888] sm:$0xff]
        %v633 = vld [vmem:[%s288 + $0x890] sm:$0xff]
        %v634 = vld [vmem:[%s288 + $0x898] sm:$0xff]
        %v635 = vld [vmem:[%s288 + $0x8a0] sm:$0xff]
        %v636 = vld [vmem:[%s288 + $0x8a8] sm:$0xff]
        %v637 = vld [vmem:[%s288 + $0x8b0] sm:$0xff]
        %v638 = vld [vmem:[%s288 + $0x8b8] sm:$0xff]
        %v639 = vld [vmem:[%s288 + $0x8c0] sm:$0xff]
        %v640 = vld [vmem:[%s288 + $0x8c8] sm:$0xff]
        %v641 = vld [vmem:[%s288 + $0x8d0] sm:$0xff]
        %v642 = vld [vmem:[%s288 + $0x8d8] sm:$0xff]
        %v643 = vld [vmem:[%s288 + $0x8e0] sm:$0xff]
        %v644 = vld [vmem:[%s288 + $0x8e8] sm:$0xff]
        %v645 = vld [vmem:[%s288 + $0x8f0] sm:$0xff]
        %v646 = vld [vmem:[%s288 + $0x8f8] sm:$0xff]
        %v647 = vld [vmem:[%s288 + $0x900] sm:$0xff]
        %v648 = vld [vmem:[%s288 + $0x908] sm:$0xff]
        %v649 = vld [vmem:[%s288 + $0x910] sm:$0xff]
        %v650 = vld [vmem:[%s288 + $0x918] sm:$0xff]
        %v651 = vld [vmem:[%s288 + $0x920] sm:$0xff]
        %v652 = vld [vmem:[%s288 + $0x928] sm:$0xff]
        %v653 = vld [vmem:[%s288 + $0x930] sm:$0xff]
        %v654 = vld [vmem:[%s288 + $0x938] sm:$0xff]
        %v655 = vld [vmem:[%s288 + $0x940] sm:$0xff]
        %v656 = vld [vmem:[%s288 + $0x948] sm:$0xff]
        %v657 = vld [vmem:[%s288 + $0x950] sm:$0xff]
        %v658 = vld [vmem:[%s288 + $0x958] sm:$0xff]
        %v659 = vld [vmem:[%s288 + $0x960] sm:$0xff]
        %v660 = vld [vmem:[%s288 + $0x968] sm:$0xff]
        %v661 = vld [vmem:[%s288 + $0x970] sm:$0xff]
        %v662 = vld [vmem:[%s288 + $0x978] sm:$0xff]
        %v663 = vld [vmem:[%s288 + $0x980] sm:$0xff]
        %v664 = vld [vmem:[%s288 + $0x988] sm:$0xff]
        %v665 = vld [vmem:[%s288 + $0x990] sm:$0xff]
        %v666 = vld [vmem:[%s288 + $0x998] sm:$0xff]
        %v667 = vld [vmem:[%s288 + $0x9a0] sm:$0xff]
        %v668 = vld [vmem:[%s288 + $0x9a8] sm:$0xff]
        %v669 = vld [vmem:[%s288 + $0x9b0] sm:$0xff]
        %v670 = vld [vmem:[%s288 + $0x9b8] sm:$0xff]
        %v671 = vld [vmem:[%s288 + $0x9c0] sm:$0xff]
        %v672 = vld [vmem:[%s288 + $0x9c8] sm:$0xff]
        %v673 = vld [vmem:[%s288 + $0x9d0] sm:$0xff]
        %v674 = vld [vmem:[%s288 + $0x9d8] sm:$0xff]
        %v675 = vld [vmem:[%s288 + $0x9e0] sm:$0xff]
        %v676 = vld [vmem:[%s288 + $0x9e8] sm:$0xff]
        %v677 = vld [vmem:[%s288 + $0x9f0] sm:$0xff]
        %v678 = vld [vmem:[%s288 + $0x9f8] sm:$0xff]
        %v679 = vld [vmem:[%s288 + $0xa00] sm:$0xff]
        %v680 = vld [vmem:[%s288 + $0xa08] sm:$0xff]
        %v681 = vld [vmem:[%s288 + $0xa10] sm:$0xff]
        %v682 = vld [vmem:[%s288 + $0xa18] sm:$0xff]
        %v683 = vld [vmem:[%s288 + $0xa20] sm:$0xff]
        %v684 = vld [vmem:[%s288 + $0xa28] sm:$0xff]
        %v685 = vld [vmem:[%s288 + $0xa30] sm:$0xff]
        %v686 = vld [vmem:[%s288 + $0xa38] sm:$0xff]
        %v687 = vld [vmem:[%s288 + $0xa40] sm:$0xff]
        %v688 = vld [vmem:[%s288 + $0xa48] sm:$0xff]
        %v689 = vld [vmem:[%s288 + $0xa50] sm:$0xff]
        %v690 = vld [vmem:[%s288 + $0xa58] sm:$0xff]
        %v691 = vld [vmem:[%s288 + $0xa60] sm:$0xff]
        %v692 = vld [vmem:[%s288 + $0xa68] sm:$0xff]
        %v693 = vld [vmem:[%s288 + $0xa70] sm:$0xff]
        %v694 = vld [vmem:[%s288 + $0xa78] sm:$0xff]
        %v695 = vld [vmem:[%s288 + $0xa80] sm:$0xff]
        %v696 = vld [vmem:[%s288 + $0xa88] sm:$0xff]
        %v697 = vld [vmem:[%s288 + $0xa90] sm:$0xff]
        %v698 = vld [vmem:[%s288 + $0xa98] sm:$0xff]
        %v699 = vld [vmem:[%s288 + $0xaa0] sm:$0xff]
        %v700 = vld [vmem:[%s288 + $0xaa8] sm:$0xff]
        %v701 = vld [vmem:[%s288 + $0xab0] sm:$0xff]
        %v702 = vld [vmem:[%s288 + $0xab8] sm:$0xff]
        %v703 = vld [vmem:[%s288 + $0xac0] sm:$0xff]
        %v704 = vld [vmem:[%s288 + $0xac8] sm:$0xff]
        %v705 = vld [vmem:[%s288 + $0xad0] sm:$0xff]
        %v706 = vld [vmem:[%s288 + $0xad8] sm:$0xff]
        %v707 = vld [vmem:[%s288 + $0xae0] sm:$0xff]
        %v708 = vld [vmem:[%s288 + $0xae8] sm:$0xff]
        %v709 = vld [vmem:[%s288 + $0xaf0] sm:$0xff]
        %v710 = vld [vmem:[%s288 + $0xaf8] sm:$0xff]
        %v711 = vld [vmem:[%s288 + $0xb00] sm:$0xff]
        %v712 = vld [vmem:[%s288 + $0xb08] sm:$0xff]
        %v713 = vld [vmem:[%s288 + $0xb10] sm:$0xff]
        %v714 = vld [vmem:[%s288 + $0xb18] sm:$0xff]
        %v715 = vld [vmem:[%s288 + $0xb20] sm:$0xff]
        %v716 = vld [vmem:[%s288 + $0xb28] sm:$0xff]
        %v717 = vld [vmem:[%s288 + $0xb30] sm:$0xff]
        %v718 = vld [vmem:[%s288 + $0xb38] sm:$0xff]
        %v719 = vld [vmem:[%s288 + $0xb40] sm:$0xff]
        %v720 = vld [vmem:[%s288 + $0xb48] sm:$0xff]
        %v721 = vld [vmem:[%s288 + $0xb50] sm:$0xff]
        %v722 = vld [vmem:[%s288 + $0xb58] sm:$0xff]
        %v723 = vld [vmem:[%s288 + $0xb60] sm:$0xff]
        %v724 = vld [vmem:[%s288 + $0xb68] sm:$0xff]
        %v725 = vld [vmem:[%s288 + $0xb70] sm:$0xff]
        %v726 = vld [vmem:[%s288 + $0xb78] sm:$0xff]
        %v727 = vld [vmem:[%s288 + $0xb80] sm:$0xff]
        %v728 = vld [vmem:[%s288 + $0xb88] sm:$0xff]
        %v729 = vld [vmem:[%s288 + $0xb90] sm:$0xff]
        %v730 = vld [vmem:[%s288 + $0xb98] sm:$0xff]
        %v731 = vld [vmem:[%s288 + $0xba0] sm:$0xff]
        %v732 = vld [vmem:[%s288 + $0xba8] sm:$0xff]
        %v733 = vld [vmem:[%s288 + $0xbb0] sm:$0xff]
        %v734 = vld [vmem:[%s288 + $0xbb8] sm:$0xff]
        %v735 = vld [vmem:[%s288 + $0xbc0] sm:$0xff]
        %v736 = vld [vmem:[%s288 + $0xbc8] sm:$0xff]
        %v737 = vld [vmem:[%s288 + $0xbd0] sm:$0xff]
        %v738 = vld [vmem:[%s288 + $0xbd8] sm:$0xff]
        %v739 = vld [vmem:[%s288 + $0xbe0] sm:$0xff]
        %v740 = vld [vmem:[%s288 + $0xbe8] sm:$0xff]
        %v741 = vld [vmem:[%s288 + $0xbf0] sm:$0xff]
        %v742 = vld [vmem:[%s288 + $0xbf8] sm:$0xff]
        %v743 = vld [vmem:[%s297] sm:$0x3]
        %v745 = vlaneseq
        %v746 = vshrl.u32 %v745, 7
        %v747 = vsub.s32 0, %v746
        %v748 = vrot.slane %v743, %v747
        %v749 = vlaneseq
        %v750 = vshrl.u32 %v749, 7
        %v751 = vsub.s32 1, %v750
        %v752 = vrot.slane %v743, %v751
        %v767 = vunpack.c.l.b16 %v347
        %v768 = vunpack.c.h.b16 %v347
        %v769 = vunpack.c.l.b16 %v348
        %v770 = vunpack.c.h.b16 %v348
        %v771 = vunpack.c.l.b16 %v349
        %v772 = vunpack.c.h.b16 %v349
        %v773 = vunpack.c.l.b16 %v350
        %v774 = vunpack.c.h.b16 %v350
        %v775 = vunpack.c.l.b16 %v351
        %v776 = vunpack.c.h.b16 %v351
        %v777 = vunpack.c.l.b16 %v352
        %v778 = vunpack.c.h.b16 %v352
        %v779 = vunpack.c.l.b16 %v353
        %v780 = vunpack.c.h.b16 %v353
        %v781 = vunpack.c.l.b16 %v354
        %v782 = vunpack.c.h.b16 %v354
        %v783 = vunpack.c.l.b16 %v355
        %v784 = vunpack.c.h.b16 %v355
        %v785 = vunpack.c.l.b16 %v356
        %v786 = vunpack.c.h.b16 %v356
        %v787 = vunpack.c.l.b16 %v357
        %v788 = vunpack.c.h.b16 %v357
        %v789 = vunpack.c.l.b16 %v358
        %v790 = vunpack.c.h.b16 %v358
        %v791 = vpack.c.b16 %v767, %v767
        %v792 = vpack.c.b16 %v768, %v768
        %v793 = vpack.c.b16 %v769, %v769
        %v794 = vpack.c.b16 %v770, %v770
        %v795 = vpack.c.b16 %v771, %v771
        %v796 = vpack.c.b16 %v772, %v772
        %v797 = vpack.c.b16 %v773, %v773
        %v798 = vpack.c.b16 %v774, %v774
        %v799 = vpack.c.b16 %v775, %v775
        %v800 = vpack.c.b16 %v776, %v776
        %v801 = vpack.c.b16 %v777, %v777
        %v802 = vpack.c.b16 %v778, %v778
        %v803 = vpack.c.b16 %v779, %v779
        %v804 = vpack.c.b16 %v780, %v780
        %v805 = vpack.c.b16 %v781, %v781
        %v806 = vpack.c.b16 %v782, %v782
        %v807 = vpack.c.b16 %v783, %v783
        %v808 = vpack.c.b16 %v784, %v784
        %v809 = vpack.c.b16 %v785, %v785
        %v810 = vpack.c.b16 %v786, %v786
        %v811 = vpack.c.b16 %v787, %v787
        %v812 = vpack.c.b16 %v788, %v788
        %v813 = vpack.c.b16 %v789, %v789
        %v814 = vpack.c.b16 %v790, %v790
        %v1223 = vunpack.c.l.b16 %v359
        %v1224 = vunpack.c.h.b16 %v359
        %v1225 = vunpack.c.l.b16 %v360
        %v1226 = vunpack.c.h.b16 %v360
        %v1227 = vunpack.c.l.b16 %v361
        %v1228 = vunpack.c.h.b16 %v361
        %v1229 = vunpack.c.l.b16 %v362
        %v1230 = vunpack.c.h.b16 %v362
        %v1231 = vunpack.c.l.b16 %v363
        %v1232 = vunpack.c.h.b16 %v363
        %v1233 = vunpack.c.l.b16 %v364
        %v1234 = vunpack.c.h.b16 %v364
        %v1235 = vunpack.c.l.b16 %v365
        %v1236 = vunpack.c.h.b16 %v365
        %v1237 = vunpack.c.l.b16 %v366
        %v1238 = vunpack.c.h.b16 %v366
        %v1239 = vunpack.c.l.b16 %v367
        %v1240 = vunpack.c.h.b16 %v367
        %v1241 = vunpack.c.l.b16 %v368
        %v1242 = vunpack.c.h.b16 %v368
        %v1243 = vunpack.c.l.b16 %v369
        %v1244 = vunpack.c.h.b16 %v369
        %v1245 = vunpack.c.l.b16 %v370
        %v1246 = vunpack.c.h.b16 %v370
        %v1247 = vunpack.c.l.b16 %v371
        %v1248 = vunpack.c.h.b16 %v371
        %v1249 = vunpack.c.l.b16 %v372
        %v1250 = vunpack.c.h.b16 %v372
        %v1251 = vunpack.c.l.b16 %v373
        %v1252 = vunpack.c.h.b16 %v373
        %v1253 = vunpack.c.l.b16 %v374
        %v1254 = vunpack.c.h.b16 %v374
        %v1255 = vunpack.c.l.b16 %v375
        %v1256 = vunpack.c.h.b16 %v375
        %v1257 = vunpack.c.l.b16 %v376
        %v1258 = vunpack.c.h.b16 %v376
        %v1259 = vunpack.c.l.b16 %v377
        %v1260 = vunpack.c.h.b16 %v377
        %v1261 = vunpack.c.l.b16 %v378
        %v1262 = vunpack.c.h.b16 %v378
        %v1263 = vunpack.c.l.b16 %v379
        %v1264 = vunpack.c.h.b16 %v379
        %v1265 = vunpack.c.l.b16 %v380
        %v1266 = vunpack.c.h.b16 %v380
        %v1267 = vunpack.c.l.b16 %v381
        %v1268 = vunpack.c.h.b16 %v381
        %v1269 = vunpack.c.l.b16 %v382
        %v1270 = vunpack.c.h.b16 %v382
        %v1271 = vunpack.c.l.b16 %v383
        %v1272 = vunpack.c.h.b16 %v383
        %v1273 = vunpack.c.l.b16 %v384
        %v1274 = vunpack.c.h.b16 %v384
        %v1275 = vunpack.c.l.b16 %v385
        %v1276 = vunpack.c.h.b16 %v385
        %v1277 = vunpack.c.l.b16 %v386
        %v1278 = vunpack.c.h.b16 %v386
        %v1279 = vunpack.c.l.b16 %v387
        %v1280 = vunpack.c.h.b16 %v387
        %v1281 = vunpack.c.l.b16 %v388
        %v1282 = vunpack.c.h.b16 %v388
        %v1283 = vunpack.c.l.b16 %v389
        %v1284 = vunpack.c.h.b16 %v389
        %v1285 = vunpack.c.l.b16 %v390
        %v1286 = vunpack.c.h.b16 %v390
        %v1287 = vunpack.c.l.b16 %v391
        %v1288 = vunpack.c.h.b16 %v391
        %v1289 = vunpack.c.l.b16 %v392
        %v1290 = vunpack.c.h.b16 %v392
        %v1291 = vunpack.c.l.b16 %v393
        %v1292 = vunpack.c.h.b16 %v393
        %v1293 = vunpack.c.l.b16 %v394
        %v1294 = vunpack.c.h.b16 %v394
        %v1295 = vunpack.c.l.b16 %v395
        %v1296 = vunpack.c.h.b16 %v395
        %v1297 = vunpack.c.l.b16 %v396
        %v1298 = vunpack.c.h.b16 %v396
        %v1299 = vunpack.c.l.b16 %v397
        %v1300 = vunpack.c.h.b16 %v397
        %v1301 = vunpack.c.l.b16 %v398
        %v1302 = vunpack.c.h.b16 %v398
        %v1303 = vunpack.c.l.b16 %v399
        %v1304 = vunpack.c.h.b16 %v399
        %v1305 = vunpack.c.l.b16 %v400
        %v1306 = vunpack.c.h.b16 %v400
        %v1307 = vunpack.c.l.b16 %v401
        %v1308 = vunpack.c.h.b16 %v401
        %v1309 = vunpack.c.l.b16 %v402
        %v1310 = vunpack.c.h.b16 %v402
        %v1311 = vunpack.c.l.b16 %v403
        %v1312 = vunpack.c.h.b16 %v403
        %v1313 = vunpack.c.l.b16 %v404
        %v1314 = vunpack.c.h.b16 %v404
        %v1315 = vunpack.c.l.b16 %v405
        %v1316 = vunpack.c.h.b16 %v405
        %v1317 = vunpack.c.l.b16 %v406
        %v1318 = vunpack.c.h.b16 %v406
        %v1319 = vunpack.c.l.b16 %v407
        %v1320 = vunpack.c.h.b16 %v407
        %v1321 = vunpack.c.l.b16 %v408
        %v1322 = vunpack.c.h.b16 %v408
        %v1323 = vunpack.c.l.b16 %v409
        %v1324 = vunpack.c.h.b16 %v409
        %v1325 = vunpack.c.l.b16 %v410
        %v1326 = vunpack.c.h.b16 %v410
        %v1327 = vunpack.c.l.b16 %v411
        %v1328 = vunpack.c.h.b16 %v411
        %v1329 = vunpack.c.l.b16 %v412
        %v1330 = vunpack.c.h.b16 %v412
        %v1331 = vunpack.c.l.b16 %v413
        %v1332 = vunpack.c.h.b16 %v413
        %v1333 = vunpack.c.l.b16 %v414
        %v1334 = vunpack.c.h.b16 %v414
        %v1335 = vunpack.c.l.b16 %v415
        %v1336 = vunpack.c.h.b16 %v415
        %v1337 = vunpack.c.l.b16 %v416
        %v1338 = vunpack.c.h.b16 %v416
        %v1339 = vunpack.c.l.b16 %v417
        %v1340 = vunpack.c.h.b16 %v417
        %v1341 = vunpack.c.l.b16 %v418
        %v1342 = vunpack.c.h.b16 %v418
        %v1343 = vunpack.c.l.b16 %v419
        %v1344 = vunpack.c.h.b16 %v419
        %v1345 = vunpack.c.l.b16 %v420
        %v1346 = vunpack.c.h.b16 %v420
        %v1347 = vunpack.c.l.b16 %v421
        %v1348 = vunpack.c.h.b16 %v421
        %v1349 = vunpack.c.l.b16 %v422
        %v1350 = vunpack.c.h.b16 %v422
        %v1351 = vunpack.c.l.b16 %v423
        %v1352 = vunpack.c.h.b16 %v423
        %v1353 = vunpack.c.l.b16 %v424
        %v1354 = vunpack.c.h.b16 %v424
        %v1355 = vunpack.c.l.b16 %v425
        %v1356 = vunpack.c.h.b16 %v425
        %v1357 = vunpack.c.l.b16 %v426
        %v1358 = vunpack.c.h.b16 %v426
        %v1359 = vunpack.c.l.b16 %v427
        %v1360 = vunpack.c.h.b16 %v427
        %v1361 = vunpack.c.l.b16 %v428
        %v1362 = vunpack.c.h.b16 %v428
        %v1363 = vunpack.c.l.b16 %v429
        %v1364 = vunpack.c.h.b16 %v429
        %v1365 = vunpack.c.l.b16 %v430
        %v1366 = vunpack.c.h.b16 %v430
        %v1367 = vunpack.c.l.b16 %v431
        %v1368 = vunpack.c.h.b16 %v431
        %v1369 = vunpack.c.l.b16 %v432
        %v1370 = vunpack.c.h.b16 %v432
        %v1371 = vunpack.c.l.b16 %v433
        %v1372 = vunpack.c.h.b16 %v433
        %v1373 = vunpack.c.l.b16 %v434
        %v1374 = vunpack.c.h.b16 %v434
        %v1375 = vunpack.c.l.b16 %v435
        %v1376 = vunpack.c.h.b16 %v435
        %v1377 = vunpack.c.l.b16 %v436
        %v1378 = vunpack.c.h.b16 %v436
        %v1379 = vunpack.c.l.b16 %v437
        %v1380 = vunpack.c.h.b16 %v437
        %v1381 = vunpack.c.l.b16 %v438
        %v1382 = vunpack.c.h.b16 %v438
        %v1383 = vunpack.c.l.b16 %v439
        %v1384 = vunpack.c.h.b16 %v439
        %v1385 = vunpack.c.l.b16 %v440
        %v1386 = vunpack.c.h.b16 %v440
        %v1387 = vunpack.c.l.b16 %v441
        %v1388 = vunpack.c.h.b16 %v441
        %v1389 = vunpack.c.l.b16 %v442
        %v1390 = vunpack.c.h.b16 %v442
        %v1391 = vunpack.c.l.b16 %v443
        %v1392 = vunpack.c.h.b16 %v443
        %v1393 = vunpack.c.l.b16 %v444
        %v1394 = vunpack.c.h.b16 %v444
        %v1395 = vunpack.c.l.b16 %v445
        %v1396 = vunpack.c.h.b16 %v445
        %v1397 = vunpack.c.l.b16 %v446
        %v1398 = vunpack.c.h.b16 %v446
        %v1399 = vunpack.c.l.b16 %v447
        %v1400 = vunpack.c.h.b16 %v447
        %v1401 = vunpack.c.l.b16 %v448
        %v1402 = vunpack.c.h.b16 %v448
        %v1403 = vunpack.c.l.b16 %v449
        %v1404 = vunpack.c.h.b16 %v449
        %v1405 = vunpack.c.l.b16 %v450
        %v1406 = vunpack.c.h.b16 %v450
        %v1407 = vunpack.c.l.b16 %v451
        %v1408 = vunpack.c.h.b16 %v451
        %v1409 = vunpack.c.l.b16 %v452
        %v1410 = vunpack.c.h.b16 %v452
        %v1411 = vunpack.c.l.b16 %v453
        %v1412 = vunpack.c.h.b16 %v453
        %v1413 = vunpack.c.l.b16 %v454
        %v1414 = vunpack.c.h.b16 %v454
        %v1415 = vunpack.c.l.b16 %v455
        %v1416 = vunpack.c.h.b16 %v455
        %v1417 = vunpack.c.l.b16 %v456
        %v1418 = vunpack.c.h.b16 %v456
        %v1419 = vunpack.c.l.b16 %v457
        %v1420 = vunpack.c.h.b16 %v457
        %v1421 = vunpack.c.l.b16 %v458
        %v1422 = vunpack.c.h.b16 %v458
        %v1423 = vunpack.c.l.b16 %v459
        %v1424 = vunpack.c.h.b16 %v459
        %v1425 = vunpack.c.l.b16 %v460
        %v1426 = vunpack.c.h.b16 %v460
        %v1427 = vunpack.c.l.b16 %v461
        %v1428 = vunpack.c.h.b16 %v461
        %v1429 = vunpack.c.l.b16 %v462
        %v1430 = vunpack.c.h.b16 %v462
        %v1431 = vunpack.c.l.b16 %v463
        %v1432 = vunpack.c.h.b16 %v463
        %v1433 = vunpack.c.l.b16 %v464
        %v1434 = vunpack.c.h.b16 %v464
        %v1435 = vunpack.c.l.b16 %v465
        %v1436 = vunpack.c.h.b16 %v465
        %v1437 = vunpack.c.l.b16 %v466
        %v1438 = vunpack.c.h.b16 %v466
        %v1439 = vunpack.c.l.b16 %v467
        %v1440 = vunpack.c.h.b16 %v467
        %v1441 = vunpack.c.l.b16 %v468
        %v1442 = vunpack.c.h.b16 %v468
        %v1443 = vunpack.c.l.b16 %v469
        %v1444 = vunpack.c.h.b16 %v469
        %v1445 = vunpack.c.l.b16 %v470
        %v1446 = vunpack.c.h.b16 %v470
        %v1447 = vunpack.c.l.b16 %v471
        %v1448 = vunpack.c.h.b16 %v471
        %v1449 = vunpack.c.l.b16 %v472
        %v1450 = vunpack.c.h.b16 %v472
        %v1451 = vunpack.c.l.b16 %v473
        %v1452 = vunpack.c.h.b16 %v473
        %v1453 = vunpack.c.l.b16 %v474
        %v1454 = vunpack.c.h.b16 %v474
        %v1455 = vunpack.c.l.b16 %v475
        %v1456 = vunpack.c.h.b16 %v475
        %v1457 = vunpack.c.l.b16 %v476
        %v1458 = vunpack.c.h.b16 %v476
        %v1459 = vunpack.c.l.b16 %v477
        %v1460 = vunpack.c.h.b16 %v477
        %v1461 = vunpack.c.l.b16 %v478
        %v1462 = vunpack.c.h.b16 %v478
        %v1463 = vunpack.c.l.b16 %v479
        %v1464 = vunpack.c.h.b16 %v479
        %v1465 = vunpack.c.l.b16 %v480
        %v1466 = vunpack.c.h.b16 %v480
        %v1467 = vunpack.c.l.b16 %v481
        %v1468 = vunpack.c.h.b16 %v481
        %v1469 = vunpack.c.l.b16 %v482
        %v1470 = vunpack.c.h.b16 %v482
        %v1471 = vunpack.c.l.b16 %v483
        %v1472 = vunpack.c.h.b16 %v483
        %v1473 = vunpack.c.l.b16 %v484
        %v1474 = vunpack.c.h.b16 %v484
        %v1475 = vunpack.c.l.b16 %v485
        %v1476 = vunpack.c.h.b16 %v485
        %v1477 = vunpack.c.l.b16 %v486
        %v1478 = vunpack.c.h.b16 %v486
        %v1479 = vunpack.c.l.b16 %v487
        %v1480 = vunpack.c.h.b16 %v487
        %v1481 = vunpack.c.l.b16 %v488
        %v1482 = vunpack.c.h.b16 %v488
        %v1483 = vunpack.c.l.b16 %v489
        %v1484 = vunpack.c.h.b16 %v489
        %v1485 = vunpack.c.l.b16 %v490
        %v1486 = vunpack.c.h.b16 %v490
        %v1487 = vunpack.c.l.b16 %v491
        %v1488 = vunpack.c.h.b16 %v491
        %v1489 = vunpack.c.l.b16 %v492
        %v1490 = vunpack.c.h.b16 %v492
        %v1491 = vunpack.c.l.b16 %v493
        %v1492 = vunpack.c.h.b16 %v493
        %v1493 = vunpack.c.l.b16 %v494
        %v1494 = vunpack.c.h.b16 %v494
        %v1495 = vunpack.c.l.b16 %v495
        %v1496 = vunpack.c.h.b16 %v495
        %v1497 = vunpack.c.l.b16 %v496
        %v1498 = vunpack.c.h.b16 %v496
        %v1499 = vunpack.c.l.b16 %v497
        %v1500 = vunpack.c.h.b16 %v497
        %v1501 = vunpack.c.l.b16 %v498
        %v1502 = vunpack.c.h.b16 %v498
        %v1503 = vunpack.c.l.b16 %v499
        %v1504 = vunpack.c.h.b16 %v499
        %v1505 = vunpack.c.l.b16 %v500
        %v1506 = vunpack.c.h.b16 %v500
        %v1507 = vunpack.c.l.b16 %v501
        %v1508 = vunpack.c.h.b16 %v501
        %v1509 = vunpack.c.l.b16 %v502
        %v1510 = vunpack.c.h.b16 %v502
        %v1511 = vunpack.c.l.b16 %v503
        %v1512 = vunpack.c.h.b16 %v503
        %v1513 = vunpack.c.l.b16 %v504
        %v1514 = vunpack.c.h.b16 %v504
        %v1515 = vunpack.c.l.b16 %v505
        %v1516 = vunpack.c.h.b16 %v505
        %v1517 = vunpack.c.l.b16 %v506
        %v1518 = vunpack.c.h.b16 %v506
        %v1519 = vunpack.c.l.b16 %v507
        %v1520 = vunpack.c.h.b16 %v507
        %v1521 = vunpack.c.l.b16 %v508
        %v1522 = vunpack.c.h.b16 %v508
        %v1523 = vunpack.c.l.b16 %v509
        %v1524 = vunpack.c.h.b16 %v509
        %v1525 = vunpack.c.l.b16 %v510
        %v1526 = vunpack.c.h.b16 %v510
        %v1527 = vunpack.c.l.b16 %v511
        %v1528 = vunpack.c.h.b16 %v511
        %v1529 = vunpack.c.l.b16 %v512
        %v1530 = vunpack.c.h.b16 %v512
        %v1531 = vunpack.c.l.b16 %v513
        %v1532 = vunpack.c.h.b16 %v513
        %v1533 = vunpack.c.l.b16 %v514
        %v1534 = vunpack.c.h.b16 %v514
        %v1535 = vunpack.c.l.b16 %v515
        %v1536 = vunpack.c.h.b16 %v515
        %v1537 = vunpack.c.l.b16 %v516
        %v1538 = vunpack.c.h.b16 %v516
        %v1539 = vunpack.c.l.b16 %v517
        %v1540 = vunpack.c.h.b16 %v517
        %v1541 = vunpack.c.l.b16 %v518
        %v1542 = vunpack.c.h.b16 %v518
        %v1543 = vunpack.c.l.b16 %v519
        %v1544 = vunpack.c.h.b16 %v519
        %v1545 = vunpack.c.l.b16 %v520
        %v1546 = vunpack.c.h.b16 %v520
        %v1547 = vunpack.c.l.b16 %v521
        %v1548 = vunpack.c.h.b16 %v521
        %v1549 = vunpack.c.l.b16 %v522
        %v1550 = vunpack.c.h.b16 %v522
        %v1551 = vunpack.c.l.b16 %v523
        %v1552 = vunpack.c.h.b16 %v523
        %v1553 = vunpack.c.l.b16 %v524
        %v1554 = vunpack.c.h.b16 %v524
        %v1555 = vunpack.c.l.b16 %v525
        %v1556 = vunpack.c.h.b16 %v525
        %v1557 = vunpack.c.l.b16 %v526
        %v1558 = vunpack.c.h.b16 %v526
        %v1559 = vunpack.c.l.b16 %v527
        %v1560 = vunpack.c.h.b16 %v527
        %v1561 = vunpack.c.l.b16 %v528
        %v1562 = vunpack.c.h.b16 %v528
        %v1563 = vunpack.c.l.b16 %v529
        %v1564 = vunpack.c.h.b16 %v529
        %v1565 = vunpack.c.l.b16 %v530
        %v1566 = vunpack.c.h.b16 %v530
        %v1567 = vunpack.c.l.b16 %v531
        %v1568 = vunpack.c.h.b16 %v531
        %v1569 = vunpack.c.l.b16 %v532
        %v1570 = vunpack.c.h.b16 %v532
        %v1571 = vunpack.c.l.b16 %v533
        %v1572 = vunpack.c.h.b16 %v533
        %v1573 = vunpack.c.l.b16 %v534
        %v1574 = vunpack.c.h.b16 %v534
        %v1575 = vunpack.c.l.b16 %v535
        %v1576 = vunpack.c.h.b16 %v535
        %v1577 = vunpack.c.l.b16 %v536
        %v1578 = vunpack.c.h.b16 %v536
        %v1579 = vunpack.c.l.b16 %v537
        %v1580 = vunpack.c.h.b16 %v537
        %v1581 = vunpack.c.l.b16 %v538
        %v1582 = vunpack.c.h.b16 %v538
        %v1583 = vunpack.c.l.b16 %v539
        %v1584 = vunpack.c.h.b16 %v539
        %v1585 = vunpack.c.l.b16 %v540
        %v1586 = vunpack.c.h.b16 %v540
        %v1587 = vunpack.c.l.b16 %v541
        %v1588 = vunpack.c.h.b16 %v541
        %v1589 = vunpack.c.l.b16 %v542
        %v1590 = vunpack.c.h.b16 %v542
        %v1591 = vunpack.c.l.b16 %v543
        %v1592 = vunpack.c.h.b16 %v543
        %v1593 = vunpack.c.l.b16 %v544
        %v1594 = vunpack.c.h.b16 %v544
        %v1595 = vunpack.c.l.b16 %v545
        %v1596 = vunpack.c.h.b16 %v545
        %v1597 = vunpack.c.l.b16 %v546
        %v1598 = vunpack.c.h.b16 %v546
        %v1599 = vunpack.c.l.b16 %v547
        %v1600 = vunpack.c.h.b16 %v547
        %v1601 = vunpack.c.l.b16 %v548
        %v1602 = vunpack.c.h.b16 %v548
        %v1603 = vunpack.c.l.b16 %v549
        %v1604 = vunpack.c.h.b16 %v549
        %v1605 = vunpack.c.l.b16 %v550
        %v1606 = vunpack.c.h.b16 %v550
        %v1607 = vunpack.c.l.b16 %v551
        %v1608 = vunpack.c.h.b16 %v551
        %v1609 = vunpack.c.l.b16 %v552
        %v1610 = vunpack.c.h.b16 %v552
        %v1611 = vunpack.c.l.b16 %v553
        %v1612 = vunpack.c.h.b16 %v553
        %v1613 = vunpack.c.l.b16 %v554
        %v1614 = vunpack.c.h.b16 %v554
        %v1615 = vunpack.c.l.b16 %v555
        %v1616 = vunpack.c.h.b16 %v555
        %v1617 = vunpack.c.l.b16 %v556
        %v1618 = vunpack.c.h.b16 %v556
        %v1619 = vunpack.c.l.b16 %v557
        %v1620 = vunpack.c.h.b16 %v557
        %v1621 = vunpack.c.l.b16 %v558
        %v1622 = vunpack.c.h.b16 %v558
        %v1623 = vunpack.c.l.b16 %v559
        %v1624 = vunpack.c.h.b16 %v559
        %v1625 = vunpack.c.l.b16 %v560
        %v1626 = vunpack.c.h.b16 %v560
        %v1627 = vunpack.c.l.b16 %v561
        %v1628 = vunpack.c.h.b16 %v561
        %v1629 = vunpack.c.l.b16 %v562
        %v1630 = vunpack.c.h.b16 %v562
        %v1631 = vunpack.c.l.b16 %v563
        %v1632 = vunpack.c.h.b16 %v563
        %v1633 = vunpack.c.l.b16 %v564
        %v1634 = vunpack.c.h.b16 %v564
        %v1635 = vunpack.c.l.b16 %v565
        %v1636 = vunpack.c.h.b16 %v565
        %v1637 = vunpack.c.l.b16 %v566
        %v1638 = vunpack.c.h.b16 %v566
        %v1639 = vunpack.c.l.b16 %v567
        %v1640 = vunpack.c.h.b16 %v567
        %v1641 = vunpack.c.l.b16 %v568
        %v1642 = vunpack.c.h.b16 %v568
        %v1643 = vunpack.c.l.b16 %v569
        %v1644 = vunpack.c.h.b16 %v569
        %v1645 = vunpack.c.l.b16 %v570
        %v1646 = vunpack.c.h.b16 %v570
        %v1647 = vunpack.c.l.b16 %v571
        %v1648 = vunpack.c.h.b16 %v571
        %v1649 = vunpack.c.l.b16 %v572
        %v1650 = vunpack.c.h.b16 %v572
        %v1651 = vunpack.c.l.b16 %v573
        %v1652 = vunpack.c.h.b16 %v573
        %v1653 = vunpack.c.l.b16 %v574
        %v1654 = vunpack.c.h.b16 %v574
        %v1655 = vunpack.c.l.b16 %v575
        %v1656 = vunpack.c.h.b16 %v575
        %v1657 = vunpack.c.l.b16 %v576
        %v1658 = vunpack.c.h.b16 %v576
        %v1659 = vunpack.c.l.b16 %v577
        %v1660 = vunpack.c.h.b16 %v577
        %v1661 = vunpack.c.l.b16 %v578
        %v1662 = vunpack.c.h.b16 %v578
        %v1663 = vunpack.c.l.b16 %v579
        %v1664 = vunpack.c.h.b16 %v579
        %v1665 = vunpack.c.l.b16 %v580
        %v1666 = vunpack.c.h.b16 %v580
        %v1667 = vunpack.c.l.b16 %v581
        %v1668 = vunpack.c.h.b16 %v581
        %v1669 = vunpack.c.l.b16 %v582
        %v1670 = vunpack.c.h.b16 %v582
        %v1671 = vunpack.c.l.b16 %v583
        %v1672 = vunpack.c.h.b16 %v583
        %v1673 = vunpack.c.l.b16 %v584
        %v1674 = vunpack.c.h.b16 %v584
        %v1675 = vunpack.c.l.b16 %v585
        %v1676 = vunpack.c.h.b16 %v585
        %v1677 = vunpack.c.l.b16 %v586
        %v1678 = vunpack.c.h.b16 %v586
        %v1679 = vunpack.c.l.b16 %v587
        %v1680 = vunpack.c.h.b16 %v587
        %v1681 = vunpack.c.l.b16 %v588
        %v1682 = vunpack.c.h.b16 %v588
        %v1683 = vunpack.c.l.b16 %v589
        %v1684 = vunpack.c.h.b16 %v589
        %v1685 = vunpack.c.l.b16 %v590
        %v1686 = vunpack.c.h.b16 %v590
        %v1687 = vunpack.c.l.b16 %v591
        %v1688 = vunpack.c.h.b16 %v591
        %v1689 = vunpack.c.l.b16 %v592
        %v1690 = vunpack.c.h.b16 %v592
        %v1691 = vunpack.c.l.b16 %v593
        %v1692 = vunpack.c.h.b16 %v593
        %v1693 = vunpack.c.l.b16 %v594
        %v1694 = vunpack.c.h.b16 %v594
        %v1695 = vunpack.c.l.b16 %v595
        %v1696 = vunpack.c.h.b16 %v595
        %v1697 = vunpack.c.l.b16 %v596
        %v1698 = vunpack.c.h.b16 %v596
        %v1699 = vunpack.c.l.b16 %v597
        %v1700 = vunpack.c.h.b16 %v597
        %v1701 = vunpack.c.l.b16 %v598
        %v1702 = vunpack.c.h.b16 %v598
        %v1703 = vunpack.c.l.b16 %v599
        %v1704 = vunpack.c.h.b16 %v599
        %v1705 = vunpack.c.l.b16 %v600
        %v1706 = vunpack.c.h.b16 %v600
        %v1707 = vunpack.c.l.b16 %v601
        %v1708 = vunpack.c.h.b16 %v601
        %v1709 = vunpack.c.l.b16 %v602
        %v1710 = vunpack.c.h.b16 %v602
        %v1711 = vunpack.c.l.b16 %v603
        %v1712 = vunpack.c.h.b16 %v603
        %v1713 = vunpack.c.l.b16 %v604
        %v1714 = vunpack.c.h.b16 %v604
        %v1715 = vunpack.c.l.b16 %v605
        %v1716 = vunpack.c.h.b16 %v605
        %v1717 = vunpack.c.l.b16 %v606
        %v1718 = vunpack.c.h.b16 %v606
        %v1719 = vunpack.c.l.b16 %v607
        %v1720 = vunpack.c.h.b16 %v607
        %v1721 = vunpack.c.l.b16 %v608
        %v1722 = vunpack.c.h.b16 %v608
        %v1723 = vunpack.c.l.b16 %v609
        %v1724 = vunpack.c.h.b16 %v609
        %v1725 = vunpack.c.l.b16 %v610
        %v1726 = vunpack.c.h.b16 %v610
        %v1727 = vunpack.c.l.b16 %v611
        %v1728 = vunpack.c.h.b16 %v611
        %v1729 = vunpack.c.l.b16 %v612
        %v1730 = vunpack.c.h.b16 %v612
        %v1731 = vunpack.c.l.b16 %v613
        %v1732 = vunpack.c.h.b16 %v613
        %v1733 = vunpack.c.l.b16 %v614
        %v1734 = vunpack.c.h.b16 %v614
        %v1735 = vunpack.c.l.b16 %v615
        %v1736 = vunpack.c.h.b16 %v615
        %v1737 = vunpack.c.l.b16 %v616
        %v1738 = vunpack.c.h.b16 %v616
        %v1739 = vunpack.c.l.b16 %v617
        %v1740 = vunpack.c.h.b16 %v617
        %v1741 = vunpack.c.l.b16 %v618
        %v1742 = vunpack.c.h.b16 %v618
        %v1743 = vunpack.c.l.b16 %v619
        %v1744 = vunpack.c.h.b16 %v619
        %v1745 = vunpack.c.l.b16 %v620
        %v1746 = vunpack.c.h.b16 %v620
        %v1747 = vunpack.c.l.b16 %v621
        %v1748 = vunpack.c.h.b16 %v621
        %v1749 = vunpack.c.l.b16 %v622
        %v1750 = vunpack.c.h.b16 %v622
        %v1751 = vunpack.c.l.b16 %v623
        %v1752 = vunpack.c.h.b16 %v623
        %v1753 = vunpack.c.l.b16 %v624
        %v1754 = vunpack.c.h.b16 %v624
        %v1755 = vunpack.c.l.b16 %v625
        %v1756 = vunpack.c.h.b16 %v625
        %v1757 = vunpack.c.l.b16 %v626
        %v1758 = vunpack.c.h.b16 %v626
        %v1759 = vunpack.c.l.b16 %v627
        %v1760 = vunpack.c.h.b16 %v627
        %v1761 = vunpack.c.l.b16 %v628
        %v1762 = vunpack.c.h.b16 %v628
        %v1763 = vunpack.c.l.b16 %v629
        %v1764 = vunpack.c.h.b16 %v629
        %v1765 = vunpack.c.l.b16 %v630
        %v1766 = vunpack.c.h.b16 %v630
        %v1767 = vunpack.c.l.b16 %v631
        %v1768 = vunpack.c.h.b16 %v631
        %v1769 = vunpack.c.l.b16 %v632
        %v1770 = vunpack.c.h.b16 %v632
        %v1771 = vunpack.c.l.b16 %v633
        %v1772 = vunpack.c.h.b16 %v633
        %v1773 = vunpack.c.l.b16 %v634
        %v1774 = vunpack.c.h.b16 %v634
        %v1775 = vunpack.c.l.b16 %v635
        %v1776 = vunpack.c.h.b16 %v635
        %v1777 = vunpack.c.l.b16 %v636
        %v1778 = vunpack.c.h.b16 %v636
        %v1779 = vunpack.c.l.b16 %v637
        %v1780 = vunpack.c.h.b16 %v637
        %v1781 = vunpack.c.l.b16 %v638
        %v1782 = vunpack.c.h.b16 %v638
        %v1783 = vunpack.c.l.b16 %v639
        %v1784 = vunpack.c.h.b16 %v639
        %v1785 = vunpack.c.l.b16 %v640
        %v1786 = vunpack.c.h.b16 %v640
        %v1787 = vunpack.c.l.b16 %v641
        %v1788 = vunpack.c.h.b16 %v641
        %v1789 = vunpack.c.l.b16 %v642
        %v1790 = vunpack.c.h.b16 %v642
        %v1791 = vunpack.c.l.b16 %v643
        %v1792 = vunpack.c.h.b16 %v643
        %v1793 = vunpack.c.l.b16 %v644
        %v1794 = vunpack.c.h.b16 %v644
        %v1795 = vunpack.c.l.b16 %v645
        %v1796 = vunpack.c.h.b16 %v645
        %v1797 = vunpack.c.l.b16 %v646
        %v1798 = vunpack.c.h.b16 %v646
        %v1799 = vunpack.c.l.b16 %v647
        %v1800 = vunpack.c.h.b16 %v647
        %v1801 = vunpack.c.l.b16 %v648
        %v1802 = vunpack.c.h.b16 %v648
        %v1803 = vunpack.c.l.b16 %v649
        %v1804 = vunpack.c.h.b16 %v649
        %v1805 = vunpack.c.l.b16 %v650
        %v1806 = vunpack.c.h.b16 %v650
        %v1807 = vunpack.c.l.b16 %v651
        %v1808 = vunpack.c.h.b16 %v651
        %v1809 = vunpack.c.l.b16 %v652
        %v1810 = vunpack.c.h.b16 %v652
        %v1811 = vunpack.c.l.b16 %v653
        %v1812 = vunpack.c.h.b16 %v653
        %v1813 = vunpack.c.l.b16 %v654
        %v1814 = vunpack.c.h.b16 %v654
        %v1815 = vunpack.c.l.b16 %v655
        %v1816 = vunpack.c.h.b16 %v655
        %v1817 = vunpack.c.l.b16 %v656
        %v1818 = vunpack.c.h.b16 %v656
        %v1819 = vunpack.c.l.b16 %v657
        %v1820 = vunpack.c.h.b16 %v657
        %v1821 = vunpack.c.l.b16 %v658
        %v1822 = vunpack.c.h.b16 %v658
        %v1823 = vunpack.c.l.b16 %v659
        %v1824 = vunpack.c.h.b16 %v659
        %v1825 = vunpack.c.l.b16 %v660
        %v1826 = vunpack.c.h.b16 %v660
        %v1827 = vunpack.c.l.b16 %v661
        %v1828 = vunpack.c.h.b16 %v661
        %v1829 = vunpack.c.l.b16 %v662
        %v1830 = vunpack.c.h.b16 %v662
        %v1831 = vunpack.c.l.b16 %v663
        %v1832 = vunpack.c.h.b16 %v663
        %v1833 = vunpack.c.l.b16 %v664
        %v1834 = vunpack.c.h.b16 %v664
        %v1835 = vunpack.c.l.b16 %v665
        %v1836 = vunpack.c.h.b16 %v665
        %v1837 = vunpack.c.l.b16 %v666
        %v1838 = vunpack.c.h.b16 %v666
        %v1839 = vunpack.c.l.b16 %v667
        %v1840 = vunpack.c.h.b16 %v667
        %v1841 = vunpack.c.l.b16 %v668
        %v1842 = vunpack.c.h.b16 %v668
        %v1843 = vunpack.c.l.b16 %v669
        %v1844 = vunpack.c.h.b16 %v669
        %v1845 = vunpack.c.l.b16 %v670
        %v1846 = vunpack.c.h.b16 %v670
        %v1847 = vunpack.c.l.b16 %v671
        %v1848 = vunpack.c.h.b16 %v671
        %v1849 = vunpack.c.l.b16 %v672
        %v1850 = vunpack.c.h.b16 %v672
        %v1851 = vunpack.c.l.b16 %v673
        %v1852 = vunpack.c.h.b16 %v673
        %v1853 = vunpack.c.l.b16 %v674
        %v1854 = vunpack.c.h.b16 %v674
        %v1855 = vunpack.c.l.b16 %v675
        %v1856 = vunpack.c.h.b16 %v675
        %v1857 = vunpack.c.l.b16 %v676
        %v1858 = vunpack.c.h.b16 %v676
        %v1859 = vunpack.c.l.b16 %v677
        %v1860 = vunpack.c.h.b16 %v677
        %v1861 = vunpack.c.l.b16 %v678
        %v1862 = vunpack.c.h.b16 %v678
        %v1863 = vunpack.c.l.b16 %v679
        %v1864 = vunpack.c.h.b16 %v679
        %v1865 = vunpack.c.l.b16 %v680
        %v1866 = vunpack.c.h.b16 %v680
        %v1867 = vunpack.c.l.b16 %v681
        %v1868 = vunpack.c.h.b16 %v681
        %v1869 = vunpack.c.l.b16 %v682
        %v1870 = vunpack.c.h.b16 %v682
        %v1871 = vunpack.c.l.b16 %v683
        %v1872 = vunpack.c.h.b16 %v683
        %v1873 = vunpack.c.l.b16 %v684
        %v1874 = vunpack.c.h.b16 %v684
        %v1875 = vunpack.c.l.b16 %v685
        %v1876 = vunpack.c.h.b16 %v685
        %v1877 = vunpack.c.l.b16 %v686
        %v1878 = vunpack.c.h.b16 %v686
        %v1879 = vunpack.c.l.b16 %v687
        %v1880 = vunpack.c.h.b16 %v687
        %v1881 = vunpack.c.l.b16 %v688
        %v1882 = vunpack.c.h.b16 %v688
        %v1883 = vunpack.c.l.b16 %v689
        %v1884 = vunpack.c.h.b16 %v689
        %v1885 = vunpack.c.l.b16 %v690
        %v1886 = vunpack.c.h.b16 %v690
        %v1887 = vunpack.c.l.b16 %v691
        %v1888 = vunpack.c.h.b16 %v691
        %v1889 = vunpack.c.l.b16 %v692
        %v1890 = vunpack.c.h.b16 %v692
        %v1891 = vunpack.c.l.b16 %v693
        %v1892 = vunpack.c.h.b16 %v693
        %v1893 = vunpack.c.l.b16 %v694
        %v1894 = vunpack.c.h.b16 %v694
        %v1895 = vunpack.c.l.b16 %v695
        %v1896 = vunpack.c.h.b16 %v695
        %v1897 = vunpack.c.l.b16 %v696
        %v1898 = vunpack.c.h.b16 %v696
        %v1899 = vunpack.c.l.b16 %v697
        %v1900 = vunpack.c.h.b16 %v697
        %v1901 = vunpack.c.l.b16 %v698
        %v1902 = vunpack.c.h.b16 %v698
        %v1903 = vunpack.c.l.b16 %v699
        %v1904 = vunpack.c.h.b16 %v699
        %v1905 = vunpack.c.l.b16 %v700
        %v1906 = vunpack.c.h.b16 %v700
        %v1907 = vunpack.c.l.b16 %v701
        %v1908 = vunpack.c.h.b16 %v701
        %v1909 = vunpack.c.l.b16 %v702
        %v1910 = vunpack.c.h.b16 %v702
        %v1911 = vunpack.c.l.b16 %v703
        %v1912 = vunpack.c.h.b16 %v703
        %v1913 = vunpack.c.l.b16 %v704
        %v1914 = vunpack.c.h.b16 %v704
        %v1915 = vunpack.c.l.b16 %v705
        %v1916 = vunpack.c.h.b16 %v705
        %v1917 = vunpack.c.l.b16 %v706
        %v1918 = vunpack.c.h.b16 %v706
        %v1919 = vunpack.c.l.b16 %v707
        %v1920 = vunpack.c.h.b16 %v707
        %v1921 = vunpack.c.l.b16 %v708
        %v1922 = vunpack.c.h.b16 %v708
        %v1923 = vunpack.c.l.b16 %v709
        %v1924 = vunpack.c.h.b16 %v709
        %v1925 = vunpack.c.l.b16 %v710
        %v1926 = vunpack.c.h.b16 %v710
        %v1927 = vunpack.c.l.b16 %v711
        %v1928 = vunpack.c.h.b16 %v711
        %v1929 = vunpack.c.l.b16 %v712
        %v1930 = vunpack.c.h.b16 %v712
        %v1931 = vunpack.c.l.b16 %v713
        %v1932 = vunpack.c.h.b16 %v713
        %v1933 = vunpack.c.l.b16 %v714
        %v1934 = vunpack.c.h.b16 %v714
        %v1935 = vunpack.c.l.b16 %v715
        %v1936 = vunpack.c.h.b16 %v715
        %v1937 = vunpack.c.l.b16 %v716
        %v1938 = vunpack.c.h.b16 %v716
        %v1939 = vunpack.c.l.b16 %v717
        %v1940 = vunpack.c.h.b16 %v717
        %v1941 = vunpack.c.l.b16 %v718
        %v1942 = vunpack.c.h.b16 %v718
        %v1943 = vunpack.c.l.b16 %v719
        %v1944 = vunpack.c.h.b16 %v719
        %v1945 = vunpack.c.l.b16 %v720
        %v1946 = vunpack.c.h.b16 %v720
        %v1947 = vunpack.c.l.b16 %v721
        %v1948 = vunpack.c.h.b16 %v721
        %v1949 = vunpack.c.l.b16 %v722
        %v1950 = vunpack.c.h.b16 %v722
        %v1951 = vunpack.c.l.b16 %v723
        %v1952 = vunpack.c.h.b16 %v723
        %v1953 = vunpack.c.l.b16 %v724
        %v1954 = vunpack.c.h.b16 %v724
        %v1955 = vunpack.c.l.b16 %v725
        %v1956 = vunpack.c.h.b16 %v725
        %v1957 = vunpack.c.l.b16 %v726
        %v1958 = vunpack.c.h.b16 %v726
        %v1959 = vunpack.c.l.b16 %v727
        %v1960 = vunpack.c.h.b16 %v727
        %v1961 = vunpack.c.l.b16 %v728
        %v1962 = vunpack.c.h.b16 %v728
        %v1963 = vunpack.c.l.b16 %v729
        %v1964 = vunpack.c.h.b16 %v729
        %v1965 = vunpack.c.l.b16 %v730
        %v1966 = vunpack.c.h.b16 %v730
        %v1967 = vunpack.c.l.b16 %v731
        %v1968 = vunpack.c.h.b16 %v731
        %v1969 = vunpack.c.l.b16 %v732
        %v1970 = vunpack.c.h.b16 %v732
        %v1971 = vunpack.c.l.b16 %v733
        %v1972 = vunpack.c.h.b16 %v733
        %v1973 = vunpack.c.l.b16 %v734
        %v1974 = vunpack.c.h.b16 %v734
        %v1975 = vunpack.c.l.b16 %v735
        %v1976 = vunpack.c.h.b16 %v735
        %v1977 = vunpack.c.l.b16 %v736
        %v1978 = vunpack.c.h.b16 %v736
        %v1979 = vunpack.c.l.b16 %v737
        %v1980 = vunpack.c.h.b16 %v737
        %v1981 = vunpack.c.l.b16 %v738
        %v1982 = vunpack.c.h.b16 %v738
        %v1983 = vunpack.c.l.b16 %v739
        %v1984 = vunpack.c.h.b16 %v739
        %v1985 = vunpack.c.l.b16 %v740
        %v1986 = vunpack.c.h.b16 %v740
        %v1987 = vunpack.c.l.b16 %v741
        %v1988 = vunpack.c.h.b16 %v741
        %v1989 = vunpack.c.l.b16 %v742
        %v1990 = vunpack.c.h.b16 %v742
        %v1991 = vpack.c.b16 %v1225, %v1223
        %v1992 = vpack.c.b16 %v1226, %v1224
        %v1993 = vpack.c.b16 %v1229, %v1227
        %v1994 = vpack.c.b16 %v1230, %v1228
        %v1995 = vpack.c.b16 %v1233, %v1231
        %v1996 = vpack.c.b16 %v1234, %v1232
        %v1997 = vpack.c.b16 %v1237, %v1235
        %v1998 = vpack.c.b16 %v1238, %v1236
        %v1999 = vpack.c.b16 %v1241, %v1239
        %v2000 = vpack.c.b16 %v1242, %v1240
        %v2001 = vpack.c.b16 %v1245, %v1243
        %v2002 = vpack.c.b16 %v1246, %v1244
        %v2003 = vpack.c.b16 %v1249, %v1247
        %v2004 = vpack.c.b16 %v1250, %v1248
        %v2005 = vpack.c.b16 %v1253, %v1251
        %v2006 = vpack.c.b16 %v1254, %v1252
        %v2007 = vpack.c.b16 %v1257, %v1255
        %v2008 = vpack.c.b16 %v1258, %v1256
        %v2009 = vpack.c.b16 %v1261, %v1259
        %v2010 = vpack.c.b16 %v1262, %v1260
        %v2011 = vpack.c.b16 %v1265, %v1263
        %v2012 = vpack.c.b16 %v1266, %v1264
        %v2013 = vpack.c.b16 %v1269, %v1267
        %v2014 = vpack.c.b16 %v1270, %v1268
        %v2015 = vpack.c.b16 %v1273, %v1271
        %v2016 = vpack.c.b16 %v1274, %v1272
        %v2017 = vpack.c.b16 %v1277, %v1275
        %v2018 = vpack.c.b16 %v1278, %v1276
        %v2019 = vpack.c.b16 %v1281, %v1279
        %v2020 = vpack.c.b16 %v1282, %v1280
        %v2021 = vpack.c.b16 %v1285, %v1283
        %v2022 = vpack.c.b16 %v1286, %v1284
        %v2023 = vpack.c.b16 %v1289, %v1287
        %v2024 = vpack.c.b16 %v1290, %v1288
        %v2025 = vpack.c.b16 %v1293, %v1291
        %v2026 = vpack.c.b16 %v1294, %v1292
        %v2027 = vpack.c.b16 %v1297, %v1295
        %v2028 = vpack.c.b16 %v1298, %v1296
        %v2029 = vpack.c.b16 %v1301, %v1299
        %v2030 = vpack.c.b16 %v1302, %v1300
        %v2031 = vpack.c.b16 %v1305, %v1303
        %v2032 = vpack.c.b16 %v1306, %v1304
        %v2033 = vpack.c.b16 %v1309, %v1307
        %v2034 = vpack.c.b16 %v1310, %v1308
        %v2035 = vpack.c.b16 %v1313, %v1311
        %v2036 = vpack.c.b16 %v1314, %v1312
        %v2037 = vpack.c.b16 %v1317, %v1315
        %v2038 = vpack.c.b16 %v1318, %v1316
        %v2039 = vpack.c.b16 %v1321, %v1319
        %v2040 = vpack.c.b16 %v1322, %v1320
        %v2041 = vpack.c.b16 %v1325, %v1323
        %v2042 = vpack.c.b16 %v1326, %v1324
        %v2043 = vpack.c.b16 %v1329, %v1327
        %v2044 = vpack.c.b16 %v1330, %v1328
        %v2045 = vpack.c.b16 %v1333, %v1331
        %v2046 = vpack.c.b16 %v1334, %v1332
        %v2047 = vpack.c.b16 %v1337, %v1335
        %v2048 = vpack.c.b16 %v1338, %v1336
        %v2049 = vpack.c.b16 %v1341, %v1339
        %v2050 = vpack.c.b16 %v1342, %v1340
        %v2051 = vpack.c.b16 %v1345, %v1343
        %v2052 = vpack.c.b16 %v1346, %v1344
        %v2053 = vpack.c.b16 %v1349, %v1347
        %v2054 = vpack.c.b16 %v1350, %v1348
        %v2055 = vpack.c.b16 %v1353, %v1351
        %v2056 = vpack.c.b16 %v1354, %v1352
        %v2057 = vpack.c.b16 %v1357, %v1355
        %v2058 = vpack.c.b16 %v1358, %v1356
        %v2059 = vpack.c.b16 %v1361, %v1359
        %v2060 = vpack.c.b16 %v1362, %v1360
        %v2061 = vpack.c.b16 %v1365, %v1363
        %v2062 = vpack.c.b16 %v1366, %v1364
        %v2063 = vpack.c.b16 %v1369, %v1367
        %v2064 = vpack.c.b16 %v1370, %v1368
        %v2065 = vpack.c.b16 %v1373, %v1371
        %v2066 = vpack.c.b16 %v1374, %v1372
        %v2067 = vpack.c.b16 %v1377, %v1375
        %v2068 = vpack.c.b16 %v1378, %v1376
        %v2069 = vpack.c.b16 %v1381, %v1379
        %v2070 = vpack.c.b16 %v1382, %v1380
        %v2071 = vpack.c.b16 %v1385, %v1383
        %v2072 = vpack.c.b16 %v1386, %v1384
        %v2073 = vpack.c.b16 %v1389, %v1387
        %v2074 = vpack.c.b16 %v1390, %v1388
        %v2075 = vpack.c.b16 %v1393, %v1391
        %v2076 = vpack.c.b16 %v1394, %v1392
        %v2077 = vpack.c.b16 %v1397, %v1395
        %v2078 = vpack.c.b16 %v1398, %v1396
        %v2079 = vpack.c.b16 %v1401, %v1399
        %v2080 = vpack.c.b16 %v1402, %v1400
        %v2081 = vpack.c.b16 %v1405, %v1403
        %v2082 = vpack.c.b16 %v1406, %v1404
        %v2083 = vpack.c.b16 %v1409, %v1407
        %v2084 = vpack.c.b16 %v1410, %v1408
        %v2085 = vpack.c.b16 %v1413, %v1411
        %v2086 = vpack.c.b16 %v1414, %v1412
        %v2087 = vpack.c.b16 %v1417, %v1415
        %v2088 = vpack.c.b16 %v1418, %v1416
        %v2089 = vpack.c.b16 %v1421, %v1419
        %v2090 = vpack.c.b16 %v1422, %v1420
        %v2091 = vpack.c.b16 %v1425, %v1423
        %v2092 = vpack.c.b16 %v1426, %v1424
        %v2093 = vpack.c.b16 %v1429, %v1427
        %v2094 = vpack.c.b16 %v1430, %v1428
        %v2095 = vpack.c.b16 %v1433, %v1431
        %v2096 = vpack.c.b16 %v1434, %v1432
        %v2097 = vpack.c.b16 %v1437, %v1435
        %v2098 = vpack.c.b16 %v1438, %v1436
        %v2099 = vpack.c.b16 %v1441, %v1439
        %v2100 = vpack.c.b16 %v1442, %v1440
        %v2101 = vpack.c.b16 %v1445, %v1443
        %v2102 = vpack.c.b16 %v1446, %v1444
        %v2103 = vpack.c.b16 %v1449, %v1447
        %v2104 = vpack.c.b16 %v1450, %v1448
        %v2105 = vpack.c.b16 %v1453, %v1451
        %v2106 = vpack.c.b16 %v1454, %v1452
        %v2107 = vpack.c.b16 %v1457, %v1455
        %v2108 = vpack.c.b16 %v1458, %v1456
        %v2109 = vpack.c.b16 %v1461, %v1459
        %v2110 = vpack.c.b16 %v1462, %v1460
        %v2111 = vpack.c.b16 %v1465, %v1463
        %v2112 = vpack.c.b16 %v1466, %v1464
        %v2113 = vpack.c.b16 %v1469, %v1467
        %v2114 = vpack.c.b16 %v1470, %v1468
        %v2115 = vpack.c.b16 %v1473, %v1471
        %v2116 = vpack.c.b16 %v1474, %v1472
        %v2117 = vpack.c.b16 %v1477, %v1475
        %v2118 = vpack.c.b16 %v1478, %v1476
        %v2119 = vpack.c.b16 %v1481, %v1479
        %v2120 = vpack.c.b16 %v1482, %v1480
        %v2121 = vpack.c.b16 %v1485, %v1483
        %v2122 = vpack.c.b16 %v1486, %v1484
        %v2123 = vpack.c.b16 %v1489, %v1487
        %v2124 = vpack.c.b16 %v1490, %v1488
        %v2125 = vpack.c.b16 %v1493, %v1491
        %v2126 = vpack.c.b16 %v1494, %v1492
        %v2127 = vpack.c.b16 %v1497, %v1495
        %v2128 = vpack.c.b16 %v1498, %v1496
        %v2129 = vpack.c.b16 %v1501, %v1499
        %v2130 = vpack.c.b16 %v1502, %v1500
        %v2131 = vpack.c.b16 %v1505, %v1503
        %v2132 = vpack.c.b16 %v1506, %v1504
        %v2133 = vpack.c.b16 %v1509, %v1507
        %v2134 = vpack.c.b16 %v1510, %v1508
        %v2135 = vpack.c.b16 %v1513, %v1511
        %v2136 = vpack.c.b16 %v1514, %v1512
        %v2137 = vpack.c.b16 %v1517, %v1515
        %v2138 = vpack.c.b16 %v1518, %v1516
        %v2139 = vpack.c.b16 %v1521, %v1519
        %v2140 = vpack.c.b16 %v1522, %v1520
        %v2141 = vpack.c.b16 %v1525, %v1523
        %v2142 = vpack.c.b16 %v1526, %v1524
        %v2143 = vpack.c.b16 %v1529, %v1527
        %v2144 = vpack.c.b16 %v1530, %v1528
        %v2145 = vpack.c.b16 %v1533, %v1531
        %v2146 = vpack.c.b16 %v1534, %v1532
        %v2147 = vpack.c.b16 %v1537, %v1535
        %v2148 = vpack.c.b16 %v1538, %v1536
        %v2149 = vpack.c.b16 %v1541, %v1539
        %v2150 = vpack.c.b16 %v1542, %v1540
        %v2151 = vpack.c.b16 %v1545, %v1543
        %v2152 = vpack.c.b16 %v1546, %v1544
        %v2153 = vpack.c.b16 %v1549, %v1547
        %v2154 = vpack.c.b16 %v1550, %v1548
        %v2155 = vpack.c.b16 %v1553, %v1551
        %v2156 = vpack.c.b16 %v1554, %v1552
        %v2157 = vpack.c.b16 %v1557, %v1555
        %v2158 = vpack.c.b16 %v1558, %v1556
        %v2159 = vpack.c.b16 %v1561, %v1559
        %v2160 = vpack.c.b16 %v1562, %v1560
        %v2161 = vpack.c.b16 %v1565, %v1563
        %v2162 = vpack.c.b16 %v1566, %v1564
        %v2163 = vpack.c.b16 %v1569, %v1567
        %v2164 = vpack.c.b16 %v1570, %v1568
        %v2165 = vpack.c.b16 %v1573, %v1571
        %v2166 = vpack.c.b16 %v1574, %v1572
        %v2167 = vpack.c.b16 %v1577, %v1575
        %v2168 = vpack.c.b16 %v1578, %v1576
        %v2169 = vpack.c.b16 %v1581, %v1579
        %v2170 = vpack.c.b16 %v1582, %v1580
        %v2171 = vpack.c.b16 %v1585, %v1583
        %v2172 = vpack.c.b16 %v1586, %v1584
        %v2173 = vpack.c.b16 %v1589, %v1587
        %v2174 = vpack.c.b16 %v1590, %v1588
        %v2175 = vpack.c.b16 %v1593, %v1591
        %v2176 = vpack.c.b16 %v1594, %v1592
        %v2177 = vpack.c.b16 %v1597, %v1595
        %v2178 = vpack.c.b16 %v1598, %v1596
        %v2179 = vpack.c.b16 %v1601, %v1599
        %v2180 = vpack.c.b16 %v1602, %v1600
        %v2181 = vpack.c.b16 %v1605, %v1603
        %v2182 = vpack.c.b16 %v1606, %v1604
        %v2183 = vpack.c.b16 %v1609, %v1607
        %v2184 = vpack.c.b16 %v1610, %v1608
        %v2185 = vpack.c.b16 %v1613, %v1611
        %v2186 = vpack.c.b16 %v1614, %v1612
        %v2187 = vpack.c.b16 %v1617, %v1615
        %v2188 = vpack.c.b16 %v1618, %v1616
        %v2189 = vpack.c.b16 %v1621, %v1619
        %v2190 = vpack.c.b16 %v1622, %v1620
        %v2191 = vpack.c.b16 %v1625, %v1623
        %v2192 = vpack.c.b16 %v1626, %v1624
        %v2193 = vpack.c.b16 %v1629, %v1627
        %v2194 = vpack.c.b16 %v1630, %v1628
        %v2195 = vpack.c.b16 %v1633, %v1631
        %v2196 = vpack.c.b16 %v1634, %v1632
        %v2197 = vpack.c.b16 %v1637, %v1635
        %v2198 = vpack.c.b16 %v1638, %v1636
        %v2199 = vpack.c.b16 %v1641, %v1639
        %v2200 = vpack.c.b16 %v1642, %v1640
        %v2201 = vpack.c.b16 %v1645, %v1643
        %v2202 = vpack.c.b16 %v1646, %v1644
        %v2203 = vpack.c.b16 %v1649, %v1647
        %v2204 = vpack.c.b16 %v1650, %v1648
        %v2205 = vpack.c.b16 %v1653, %v1651
        %v2206 = vpack.c.b16 %v1654, %v1652
        %v2207 = vpack.c.b16 %v1657, %v1655
        %v2208 = vpack.c.b16 %v1658, %v1656
        %v2209 = vpack.c.b16 %v1661, %v1659
        %v2210 = vpack.c.b16 %v1662, %v1660
        %v2211 = vpack.c.b16 %v1665, %v1663
        %v2212 = vpack.c.b16 %v1666, %v1664
        %v2213 = vpack.c.b16 %v1669, %v1667
        %v2214 = vpack.c.b16 %v1670, %v1668
        %v2215 = vpack.c.b16 %v1673, %v1671
        %v2216 = vpack.c.b16 %v1674, %v1672
        %v2217 = vpack.c.b16 %v1677, %v1675
        %v2218 = vpack.c.b16 %v1678, %v1676
        %v2219 = vpack.c.b16 %v1681, %v1679
        %v2220 = vpack.c.b16 %v1682, %v1680
        %v2221 = vpack.c.b16 %v1685, %v1683
        %v2222 = vpack.c.b16 %v1686, %v1684
        %v2223 = vpack.c.b16 %v1689, %v1687
        %v2224 = vpack.c.b16 %v1690, %v1688
        %v2225 = vpack.c.b16 %v1693, %v1691
        %v2226 = vpack.c.b16 %v1694, %v1692
        %v2227 = vpack.c.b16 %v1697, %v1695
        %v2228 = vpack.c.b16 %v1698, %v1696
        %v2229 = vpack.c.b16 %v1701, %v1699
        %v2230 = vpack.c.b16 %v1702, %v1700
        %v2231 = vpack.c.b16 %v1705, %v1703
        %v2232 = vpack.c.b16 %v1706, %v1704
        %v2233 = vpack.c.b16 %v1709, %v1707
        %v2234 = vpack.c.b16 %v1710, %v1708
        %v2235 = vpack.c.b16 %v1713, %v1711
        %v2236 = vpack.c.b16 %v1714, %v1712
        %v2237 = vpack.c.b16 %v1717, %v1715
        %v2238 = vpack.c.b16 %v1718, %v1716
        %v2239 = vpack.c.b16 %v1721, %v1719
        %v2240 = vpack.c.b16 %v1722, %v1720
        %v2241 = vpack.c.b16 %v1725, %v1723
        %v2242 = vpack.c.b16 %v1726, %v1724
        %v2243 = vpack.c.b16 %v1729, %v1727
        %v2244 = vpack.c.b16 %v1730, %v1728
        %v2245 = vpack.c.b16 %v1733, %v1731
        %v2246 = vpack.c.b16 %v1734, %v1732
        %v2247 = vpack.c.b16 %v1737, %v1735
        %v2248 = vpack.c.b16 %v1738, %v1736
        %v2249 = vpack.c.b16 %v1741, %v1739
        %v2250 = vpack.c.b16 %v1742, %v1740
        %v2251 = vpack.c.b16 %v1745, %v1743
        %v2252 = vpack.c.b16 %v1746, %v1744
        %v2253 = vpack.c.b16 %v1749, %v1747
        %v2254 = vpack.c.b16 %v1750, %v1748
        %v2255 = vpack.c.b16 %v1753, %v1751
        %v2256 = vpack.c.b16 %v1754, %v1752
        %v2257 = vpack.c.b16 %v1757, %v1755
        %v2258 = vpack.c.b16 %v1758, %v1756
        %v2259 = vpack.c.b16 %v1761, %v1759
        %v2260 = vpack.c.b16 %v1762, %v1760
        %v2261 = vpack.c.b16 %v1765, %v1763
        %v2262 = vpack.c.b16 %v1766, %v1764
        %v2263 = vpack.c.b16 %v1769, %v1767
        %v2264 = vpack.c.b16 %v1770, %v1768
        %v2265 = vpack.c.b16 %v1773, %v1771
        %v2266 = vpack.c.b16 %v1774, %v1772
        %v2267 = vpack.c.b16 %v1777, %v1775
        %v2268 = vpack.c.b16 %v1778, %v1776
        %v2269 = vpack.c.b16 %v1781, %v1779
        %v2270 = vpack.c.b16 %v1782, %v1780
        %v2271 = vpack.c.b16 %v1785, %v1783
        %v2272 = vpack.c.b16 %v1786, %v1784
        %v2273 = vpack.c.b16 %v1789, %v1787
        %v2274 = vpack.c.b16 %v1790, %v1788
        %v2275 = vpack.c.b16 %v1793, %v1791
        %v2276 = vpack.c.b16 %v1794, %v1792
        %v2277 = vpack.c.b16 %v1797, %v1795
        %v2278 = vpack.c.b16 %v1798, %v1796
        %v2279 = vpack.c.b16 %v1801, %v1799
        %v2280 = vpack.c.b16 %v1802, %v1800
        %v2281 = vpack.c.b16 %v1805, %v1803
        %v2282 = vpack.c.b16 %v1806, %v1804
        %v2283 = vpack.c.b16 %v1809, %v1807
        %v2284 = vpack.c.b16 %v1810, %v1808
        %v2285 = vpack.c.b16 %v1813, %v1811
        %v2286 = vpack.c.b16 %v1814, %v1812
        %v2287 = vpack.c.b16 %v1817, %v1815
        %v2288 = vpack.c.b16 %v1818, %v1816
        %v2289 = vpack.c.b16 %v1821, %v1819
        %v2290 = vpack.c.b16 %v1822, %v1820
        %v2291 = vpack.c.b16 %v1825, %v1823
        %v2292 = vpack.c.b16 %v1826, %v1824
        %v2293 = vpack.c.b16 %v1829, %v1827
        %v2294 = vpack.c.b16 %v1830, %v1828
        %v2295 = vpack.c.b16 %v1833, %v1831
        %v2296 = vpack.c.b16 %v1834, %v1832
        %v2297 = vpack.c.b16 %v1837, %v1835
        %v2298 = vpack.c.b16 %v1838, %v1836
        %v2299 = vpack.c.b16 %v1841, %v1839
        %v2300 = vpack.c.b16 %v1842, %v1840
        %v2301 = vpack.c.b16 %v1845, %v1843
        %v2302 = vpack.c.b16 %v1846, %v1844
        %v2303 = vpack.c.b16 %v1849, %v1847
        %v2304 = vpack.c.b16 %v1850, %v1848
        %v2305 = vpack.c.b16 %v1853, %v1851
        %v2306 = vpack.c.b16 %v1854, %v1852
        %v2307 = vpack.c.b16 %v1857, %v1855
        %v2308 = vpack.c.b16 %v1858, %v1856
        %v2309 = vpack.c.b16 %v1861, %v1859
        %v2310 = vpack.c.b16 %v1862, %v1860
        %v2311 = vpack.c.b16 %v1865, %v1863
        %v2312 = vpack.c.b16 %v1866, %v1864
        %v2313 = vpack.c.b16 %v1869, %v1867
        %v2314 = vpack.c.b16 %v1870, %v1868
        %v2315 = vpack.c.b16 %v1873, %v1871
        %v2316 = vpack.c.b16 %v1874, %v1872
        %v2317 = vpack.c.b16 %v1877, %v1875
        %v2318 = vpack.c.b16 %v1878, %v1876
        %v2319 = vpack.c.b16 %v1881, %v1879
        %v2320 = vpack.c.b16 %v1882, %v1880
        %v2321 = vpack.c.b16 %v1885, %v1883
        %v2322 = vpack.c.b16 %v1886, %v1884
        %v2323 = vpack.c.b16 %v1889, %v1887
        %v2324 = vpack.c.b16 %v1890, %v1888
        %v2325 = vpack.c.b16 %v1893, %v1891
        %v2326 = vpack.c.b16 %v1894, %v1892
        %v2327 = vpack.c.b16 %v1897, %v1895
        %v2328 = vpack.c.b16 %v1898, %v1896
        %v2329 = vpack.c.b16 %v1901, %v1899
        %v2330 = vpack.c.b16 %v1902, %v1900
        %v2331 = vpack.c.b16 %v1905, %v1903
        %v2332 = vpack.c.b16 %v1906, %v1904
        %v2333 = vpack.c.b16 %v1909, %v1907
        %v2334 = vpack.c.b16 %v1910, %v1908
        %v2335 = vpack.c.b16 %v1913, %v1911
        %v2336 = vpack.c.b16 %v1914, %v1912
        %v2337 = vpack.c.b16 %v1917, %v1915
        %v2338 = vpack.c.b16 %v1918, %v1916
        %v2339 = vpack.c.b16 %v1921, %v1919
        %v2340 = vpack.c.b16 %v1922, %v1920
        %v2341 = vpack.c.b16 %v1925, %v1923
        %v2342 = vpack.c.b16 %v1926, %v1924
        %v2343 = vpack.c.b16 %v1929, %v1927
        %v2344 = vpack.c.b16 %v1930, %v1928
        %v2345 = vpack.c.b16 %v1933, %v1931
        %v2346 = vpack.c.b16 %v1934, %v1932
        %v2347 = vpack.c.b16 %v1937, %v1935
        %v2348 = vpack.c.b16 %v1938, %v1936
        %v2349 = vpack.c.b16 %v1941, %v1939
        %v2350 = vpack.c.b16 %v1942, %v1940
        %v2351 = vpack.c.b16 %v1945, %v1943
        %v2352 = vpack.c.b16 %v1946, %v1944
        %v2353 = vpack.c.b16 %v1949, %v1947
        %v2354 = vpack.c.b16 %v1950, %v1948
        %v2355 = vpack.c.b16 %v1953, %v1951
        %v2356 = vpack.c.b16 %v1954, %v1952
        %v2357 = vpack.c.b16 %v1957, %v1955
        %v2358 = vpack.c.b16 %v1958, %v1956
        %v2359 = vpack.c.b16 %v1961, %v1959
        %v2360 = vpack.c.b16 %v1962, %v1960
        %v2361 = vpack.c.b16 %v1965, %v1963
        %v2362 = vpack.c.b16 %v1966, %v1964
        %v2363 = vpack.c.b16 %v1969, %v1967
        %v2364 = vpack.c.b16 %v1970, %v1968
        %v2365 = vpack.c.b16 %v1973, %v1971
        %v2366 = vpack.c.b16 %v1974, %v1972
        %v2367 = vpack.c.b16 %v1977, %v1975
        %v2368 = vpack.c.b16 %v1978, %v1976
        %v2369 = vpack.c.b16 %v1981, %v1979
        %v2370 = vpack.c.b16 %v1982, %v1980
        %v2371 = vpack.c.b16 %v1985, %v1983
        %v2372 = vpack.c.b16 %v1986, %v1984
        %v2373 = vpack.c.b16 %v1989, %v1987
        %v2374 = vpack.c.b16 %v1990, %v1988
        %2759 = vmatprep.subr.bf16.mxu0 %v2006
        %2760 = vmatpush1.bf16.msra.mxu0 %v2005
        %2761 = vmatprep.subr.bf16.mxu0 %v2004
        %2762 = vmatpush1.bf16.msra.mxu0 %v2003
        %2763 = vmatprep.subr.bf16.mxu0 %v2002
        %2764 = vmatpush1.bf16.msra.mxu0 %v2001
        %2765 = vmatprep.subr.bf16.mxu0 %v2000
        %2766 = vmatpush1.bf16.msra.mxu0 %v1999
        %2767 = vmatprep.subr.bf16.mxu0 %v1998
        %2768 = vmatpush1.bf16.msra.mxu0 %v1997
        %2769 = vmatprep.subr.bf16.mxu0 %v1996
        %2770 = vmatpush1.bf16.msra.mxu0 %v1995
        %2771 = vmatprep.subr.bf16.mxu0 %v1994
        %2772 = vmatpush1.bf16.msra.mxu0 %v1993
        %2773 = vmatprep.subr.bf16.mxu0 %v1992
        %2774 = vmatpush1.bf16.msra.mxu0 %v1991
        %2775 = vmatprep.subr.bf16.mxu0 %v2022
        %2776 = vmatpush2.bf16.msra.mxu0 %v2021
        %2777 = vmatprep.subr.bf16.mxu0 %v2020
        %2778 = vmatpush2.bf16.msra.mxu0 %v2019
        %2779 = vmatprep.subr.bf16.mxu0 %v2018
        %2780 = vmatpush2.bf16.msra.mxu0 %v2017
        %2781 = vmatprep.subr.bf16.mxu0 %v2016
        %2782 = vmatpush2.bf16.msra.mxu0 %v2015
        %2783 = vmatprep.subr.bf16.mxu0 %v2014
        %2784 = vmatpush2.bf16.msra.mxu0 %v2013
        %2785 = vmatprep.subr.bf16.mxu0 %v2012
        %2786 = vmatpush2.bf16.msra.mxu0 %v2011
        %2787 = vmatprep.subr.bf16.mxu0 %v2010
        %2788 = vmatpush2.bf16.msra.mxu0 %v2009
        %2789 = vmatprep.subr.bf16.mxu0 %v2008
        %2790 = vmatpush2.bf16.msra.mxu0 %v2007
        %2791 = vmatprep.mubr.bf16.mxu0 %v792
        %2792 = vmatmul.mubr.bf16.gmra.mxu0 %v791
        %v2793 = vpop.f32.mrf.mxu0
        %v2794 = vadd.f32 %v748, %v2793
        %v2795 = vpop.f32.mrf.mxu0
        %v2796 = vadd.f32 %v752, %v2795
        %v2797 = vpop.f32.mrf.mxu0
        %v2798 = vpop.f32.mrf.mxu0
        %2799 = vdwg.mxu0
        %2800 = vmatprep.subr.bf16.mxu0 %v2038
        %2801 = vmatpush1.bf16.msra.mxu0 %v2037
        %2802 = vmatprep.subr.bf16.mxu0 %v2036
        %2803 = vmatpush1.bf16.msra.mxu0 %v2035
        %2804 = vmatprep.subr.bf16.mxu0 %v2034
        %2805 = vmatpush1.bf16.msra.mxu0 %v2033
        %2806 = vmatprep.subr.bf16.mxu0 %v2032
        %2807 = vmatpush1.bf16.msra.mxu0 %v2031
        %2808 = vmatprep.subr.bf16.mxu0 %v2030
        %2809 = vmatpush1.bf16.msra.mxu0 %v2029
        %2810 = vmatprep.subr.bf16.mxu0 %v2028
        %2811 = vmatpush1.bf16.msra.mxu0 %v2027
        %2812 = vmatprep.subr.bf16.mxu0 %v2026
        %2813 = vmatpush1.bf16.msra.mxu0 %v2025
        %2814 = vmatprep.subr.bf16.mxu0 %v2024
        %2815 = vmatpush1.bf16.msra.mxu0 %v2023
        %2816 = vmatprep.subr.bf16.mxu0 %v2054
        %2817 = vmatpush2.bf16.msra.mxu0 %v2053
        %2818 = vmatprep.subr.bf16.mxu0 %v2052
        %2819 = vmatpush2.bf16.msra.mxu0 %v2051
        %2820 = vmatprep.subr.bf16.mxu0 %v2050
        %2821 = vmatpush2.bf16.msra.mxu0 %v2049
        %2822 = vmatprep.subr.bf16.mxu0 %v2048
        %2823 = vmatpush2.bf16.msra.mxu0 %v2047
        %2824 = vmatprep.subr.bf16.mxu0 %v2046
        %2825 = vmatpush2.bf16.msra.mxu0 %v2045
        %2826 = vmatprep.subr.bf16.mxu0 %v2044
        %2827 = vmatpush2.bf16.msra.mxu0 %v2043
        %2828 = vmatprep.subr.bf16.mxu0 %v2042
        %2829 = vmatpush2.bf16.msra.mxu0 %v2041
        %2830 = vmatprep.subr.bf16.mxu0 %v2040
        %2831 = vmatpush2.bf16.msra.mxu0 %v2039
        %2832 = vmatprep.mubr.bf16.mxu0 %v794
        %2833 = vmatmul.mubr.bf16.gmra.mxu0 %v793
        %v2834 = vpop.f32.mrf.mxu0
        %v2835 = vadd.f32 %v2794, %v2834
        %v2836 = vpop.f32.mrf.mxu0
        %v2837 = vadd.f32 %v2796, %v2836
        %v2838 = vpop.f32.mrf.mxu0
        %v2839 = vpop.f32.mrf.mxu0
        %2840 = vdwg.mxu0
        %2841 = vmatprep.subr.bf16.mxu0 %v2070
        %2842 = vmatpush1.bf16.msra.mxu0 %v2069
        %2843 = vmatprep.subr.bf16.mxu0 %v2068
        %2844 = vmatpush1.bf16.msra.mxu0 %v2067
        %2845 = vmatprep.subr.bf16.mxu0 %v2066
        %2846 = vmatpush1.bf16.msra.mxu0 %v2065
        %2847 = vmatprep.subr.bf16.mxu0 %v2064
        %2848 = vmatpush1.bf16.msra.mxu0 %v2063
        %2849 = vmatprep.subr.bf16.mxu0 %v2062
        %2850 = vmatpush1.bf16.msra.mxu0 %v2061
        %2851 = vmatprep.subr.bf16.mxu0 %v2060
        %2852 = vmatpush1.bf16.msra.mxu0 %v2059
        %2853 = vmatprep.subr.bf16.mxu0 %v2058
        %2854 = vmatpush1.bf16.msra.mxu0 %v2057
        %2855 = vmatprep.subr.bf16.mxu0 %v2056
        %2856 = vmatpush1.bf16.msra.mxu0 %v2055
        %2857 = vmatprep.subr.bf16.mxu0 %v2086
        %2858 = vmatpush2.bf16.msra.mxu0 %v2085
        %2859 = vmatprep.subr.bf16.mxu0 %v2084
        %2860 = vmatpush2.bf16.msra.mxu0 %v2083
        %2861 = vmatprep.subr.bf16.mxu0 %v2082
        %2862 = vmatpush2.bf16.msra.mxu0 %v2081
        %2863 = vmatprep.subr.bf16.mxu0 %v2080
        %2864 = vmatpush2.bf16.msra.mxu0 %v2079
        %2865 = vmatprep.subr.bf16.mxu0 %v2078
        %2866 = vmatpush2.bf16.msra.mxu0 %v2077
        %2867 = vmatprep.subr.bf16.mxu0 %v2076
        %2868 = vmatpush2.bf16.msra.mxu0 %v2075
        %2869 = vmatprep.subr.bf16.mxu0 %v2074
        %2870 = vmatpush2.bf16.msra.mxu0 %v2073
        %2871 = vmatprep.subr.bf16.mxu0 %v2072
        %2872 = vmatpush2.bf16.msra.mxu0 %v2071
        %2873 = vmatprep.mubr.bf16.mxu0 %v796
        %2874 = vmatmul.mubr.bf16.gmra.mxu0 %v795
        %v2875 = vpop.f32.mrf.mxu0
        %v2876 = vadd.f32 %v2835, %v2875
        %v2877 = vpop.f32.mrf.mxu0
        %v2878 = vadd.f32 %v2837, %v2877
        %v2879 = vpop.f32.mrf.mxu0
        %v2880 = vpop.f32.mrf.mxu0
        %2881 = vdwg.mxu0
        %2882 = vmatprep.subr.bf16.mxu0 %v2102
        %2883 = vmatpush1.bf16.msra.mxu0 %v2101
        %2884 = vmatprep.subr.bf16.mxu0 %v2100
        %2885 = vmatpush1.bf16.msra.mxu0 %v2099
        %2886 = vmatprep.subr.bf16.mxu0 %v2098
        %2887 = vmatpush1.bf16.msra.mxu0 %v2097
        %2888 = vmatprep.subr.bf16.mxu0 %v2096
        %2889 = vmatpush1.bf16.msra.mxu0 %v2095
        %2890 = vmatprep.subr.bf16.mxu0 %v2094
        %2891 = vmatpush1.bf16.msra.mxu0 %v2093
        %2892 = vmatprep.subr.bf16.mxu0 %v2092
        %2893 = vmatpush1.bf16.msra.mxu0 %v2091
        %2894 = vmatprep.subr.bf16.mxu0 %v2090
        %2895 = vmatpush1.bf16.msra.mxu0 %v2089
        %2896 = vmatprep.subr.bf16.mxu0 %v2088
        %2897 = vmatpush1.bf16.msra.mxu0 %v2087
        %2898 = vmatprep.subr.bf16.mxu0 %v2118
        %2899 = vmatpush2.bf16.msra.mxu0 %v2117
        %2900 = vmatprep.subr.bf16.mxu0 %v2116
        %2901 = vmatpush2.bf16.msra.mxu0 %v2115
        %2902 = vmatprep.subr.bf16.mxu0 %v2114
        %2903 = vmatpush2.bf16.msra.mxu0 %v2113
        %2904 = vmatprep.subr.bf16.mxu0 %v2112
        %2905 = vmatpush2.bf16.msra.mxu0 %v2111
        %2906 = vmatprep.subr.bf16.mxu0 %v2110
        %2907 = vmatpush2.bf16.msra.mxu0 %v2109
        %2908 = vmatprep.subr.bf16.mxu0 %v2108
        %2909 = vmatpush2.bf16.msra.mxu0 %v2107
        %2910 = vmatprep.subr.bf16.mxu0 %v2106
        %2911 = vmatpush2.bf16.msra.mxu0 %v2105
        %2912 = vmatprep.subr.bf16.mxu0 %v2104
        %2913 = vmatpush2.bf16.msra.mxu0 %v2103
        %2914 = vmatprep.mubr.bf16.mxu0 %v798
        %2915 = vmatmul.mubr.bf16.gmra.mxu0 %v797
        %v2916 = vpop.f32.mrf.mxu0
        %v2917 = vadd.f32 %v2876, %v2916
        %v2918 = vpop.f32.mrf.mxu0
        %v2919 = vadd.f32 %v2878, %v2918
        %v2920 = vpop.f32.mrf.mxu0
        %v2921 = vpop.f32.mrf.mxu0
        %2922 = vdwg.mxu0
        %2923 = vmatprep.subr.bf16.mxu0 %v2134
        %2924 = vmatpush1.bf16.msra.mxu0 %v2133
        %2925 = vmatprep.subr.bf16.mxu0 %v2132
        %2926 = vmatpush1.bf16.msra.mxu0 %v2131
        %2927 = vmatprep.subr.bf16.mxu0 %v2130
        %2928 = vmatpush1.bf16.msra.mxu0 %v2129
        %2929 = vmatprep.subr.bf16.mxu0 %v2128
        %2930 = vmatpush1.bf16.msra.mxu0 %v2127
        %2931 = vmatprep.subr.bf16.mxu0 %v2126
        %2932 = vmatpush1.bf16.msra.mxu0 %v2125
        %2933 = vmatprep.subr.bf16.mxu0 %v2124
        %2934 = vmatpush1.bf16.msra.mxu0 %v2123
        %2935 = vmatprep.subr.bf16.mxu0 %v2122
        %2936 = vmatpush1.bf16.msra.mxu0 %v2121
        %2937 = vmatprep.subr.bf16.mxu0 %v2120
        %2938 = vmatpush1.bf16.msra.mxu0 %v2119
        %2939 = vmatprep.subr.bf16.mxu0 %v2150
        %2940 = vmatpush2.bf16.msra.mxu0 %v2149
        %2941 = vmatprep.subr.bf16.mxu0 %v2148
        %2942 = vmatpush2.bf16.msra.mxu0 %v2147
        %2943 = vmatprep.subr.bf16.mxu0 %v2146
        %2944 = vmatpush2.bf16.msra.mxu0 %v2145
        %2945 = vmatprep.subr.bf16.mxu0 %v2144
        %2946 = vmatpush2.bf16.msra.mxu0 %v2143
        %2947 = vmatprep.subr.bf16.mxu0 %v2142
        %2948 = vmatpush2.bf16.msra.mxu0 %v2141
        %2949 = vmatprep.subr.bf16.mxu0 %v2140
        %2950 = vmatpush2.bf16.msra.mxu0 %v2139
        %2951 = vmatprep.subr.bf16.mxu0 %v2138
        %2952 = vmatpush2.bf16.msra.mxu0 %v2137
        %2953 = vmatprep.subr.bf16.mxu0 %v2136
        %2954 = vmatpush2.bf16.msra.mxu0 %v2135
        %2955 = vmatprep.mubr.bf16.mxu0 %v800
        %2956 = vmatmul.mubr.bf16.gmra.mxu0 %v799
        %v2957 = vpop.f32.mrf.mxu0
        %v2958 = vadd.f32 %v2917, %v2957
        %v2959 = vpop.f32.mrf.mxu0
        %v2960 = vadd.f32 %v2919, %v2959
        %v2961 = vpop.f32.mrf.mxu0
        %v2962 = vpop.f32.mrf.mxu0
        %2963 = vdwg.mxu0
        %2964 = vmatprep.subr.bf16.mxu0 %v2166
        %2965 = vmatpush1.bf16.msra.mxu0 %v2165
        %2966 = vmatprep.subr.bf16.mxu0 %v2164
        %2967 = vmatpush1.bf16.msra.mxu0 %v2163
        %2968 = vmatprep.subr.bf16.mxu0 %v2162
        %2969 = vmatpush1.bf16.msra.mxu0 %v2161
        %2970 = vmatprep.subr.bf16.mxu0 %v2160
        %2971 = vmatpush1.bf16.msra.mxu0 %v2159
        %2972 = vmatprep.subr.bf16.mxu0 %v2158
        %2973 = vmatpush1.bf16.msra.mxu0 %v2157
        %2974 = vmatprep.subr.bf16.mxu0 %v2156
        %2975 = vmatpush1.bf16.msra.mxu0 %v2155
        %2976 = vmatprep.subr.bf16.mxu0 %v2154
        %2977 = vmatpush1.bf16.msra.mxu0 %v2153
        %2978 = vmatprep.subr.bf16.mxu0 %v2152
        %2979 = vmatpush1.bf16.msra.mxu0 %v2151
        %2980 = vmatprep.subr.bf16.mxu0 %v2182
        %2981 = vmatpush2.bf16.msra.mxu0 %v2181
        %2982 = vmatprep.subr.bf16.mxu0 %v2180
        %2983 = vmatpush2.bf16.msra.mxu0 %v2179
        %2984 = vmatprep.subr.bf16.mxu0 %v2178
        %2985 = vmatpush2.bf16.msra.mxu0 %v2177
        %2986 = vmatprep.subr.bf16.mxu0 %v2176
        %2987 = vmatpush2.bf16.msra.mxu0 %v2175
        %2988 = vmatprep.subr.bf16.mxu0 %v2174
        %2989 = vmatpush2.bf16.msra.mxu0 %v2173
        %2990 = vmatprep.subr.bf16.mxu0 %v2172
        %2991 = vmatpush2.bf16.msra.mxu0 %v2171
        %2992 = vmatprep.subr.bf16.mxu0 %v2170
        %2993 = vmatpush2.bf16.msra.mxu0 %v2169
        %2994 = vmatprep.subr.bf16.mxu0 %v2168
        %2995 = vmatpush2.bf16.msra.mxu0 %v2167
        %2996 = vmatprep.mubr.bf16.mxu0 %v802
        %2997 = vmatmul.mubr.bf16.gmra.mxu0 %v801
        %v2998 = vpop.f32.mrf.mxu0
        %v2999 = vadd.f32 %v2958, %v2998
        %v3000 = vpop.f32.mrf.mxu0
        %v3001 = vadd.f32 %v2960, %v3000
        %v3002 = vpop.f32.mrf.mxu0
        %v3003 = vpop.f32.mrf.mxu0
        %3004 = vdwg.mxu0
        %3005 = vmatprep.subr.bf16.mxu0 %v2198
        %3006 = vmatpush1.bf16.msra.mxu0 %v2197
        %3007 = vmatprep.subr.bf16.mxu0 %v2196
        %3008 = vmatpush1.bf16.msra.mxu0 %v2195
        %3009 = vmatprep.subr.bf16.mxu0 %v2194
        %3010 = vmatpush1.bf16.msra.mxu0 %v2193
        %3011 = vmatprep.subr.bf16.mxu0 %v2192
        %3012 = vmatpush1.bf16.msra.mxu0 %v2191
        %3013 = vmatprep.subr.bf16.mxu0 %v2190
        %3014 = vmatpush1.bf16.msra.mxu0 %v2189
        %3015 = vmatprep.subr.bf16.mxu0 %v2188
        %3016 = vmatpush1.bf16.msra.mxu0 %v2187
        %3017 = vmatprep.subr.bf16.mxu0 %v2186
        %3018 = vmatpush1.bf16.msra.mxu0 %v2185
        %3019 = vmatprep.subr.bf16.mxu0 %v2184
        %3020 = vmatpush1.bf16.msra.mxu0 %v2183
        %3021 = vmatprep.subr.bf16.mxu0 %v2214
        %3022 = vmatpush2.bf16.msra.mxu0 %v2213
        %3023 = vmatprep.subr.bf16.mxu0 %v2212
        %3024 = vmatpush2.bf16.msra.mxu0 %v2211
        %3025 = vmatprep.subr.bf16.mxu0 %v2210
        %3026 = vmatpush2.bf16.msra.mxu0 %v2209
        %3027 = vmatprep.subr.bf16.mxu0 %v2208
        %3028 = vmatpush2.bf16.msra.mxu0 %v2207
        %3029 = vmatprep.subr.bf16.mxu0 %v2206
        %3030 = vmatpush2.bf16.msra.mxu0 %v2205
        %3031 = vmatprep.subr.bf16.mxu0 %v2204
        %3032 = vmatpush2.bf16.msra.mxu0 %v2203
        %3033 = vmatprep.subr.bf16.mxu0 %v2202
        %3034 = vmatpush2.bf16.msra.mxu0 %v2201
        %3035 = vmatprep.subr.bf16.mxu0 %v2200
        %3036 = vmatpush2.bf16.msra.mxu0 %v2199
        %3037 = vmatprep.mubr.bf16.mxu0 %v804
        %3038 = vmatmul.mubr.bf16.gmra.mxu0 %v803
        %v3039 = vpop.f32.mrf.mxu0
        %v3040 = vadd.f32 %v2999, %v3039
        %v3041 = vpop.f32.mrf.mxu0
        %v3042 = vadd.f32 %v3001, %v3041
        %v3043 = vpop.f32.mrf.mxu0
        %v3044 = vpop.f32.mrf.mxu0
        %3045 = vdwg.mxu0
        %3046 = vmatprep.subr.bf16.mxu0 %v2230
        %3047 = vmatpush1.bf16.msra.mxu0 %v2229
        %3048 = vmatprep.subr.bf16.mxu0 %v2228
        %3049 = vmatpush1.bf16.msra.mxu0 %v2227
        %3050 = vmatprep.subr.bf16.mxu0 %v2226
        %3051 = vmatpush1.bf16.msra.mxu0 %v2225
        %3052 = vmatprep.subr.bf16.mxu0 %v2224
        %3053 = vmatpush1.bf16.msra.mxu0 %v2223
        %3054 = vmatprep.subr.bf16.mxu0 %v2222
        %3055 = vmatpush1.bf16.msra.mxu0 %v2221
        %3056 = vmatprep.subr.bf16.mxu0 %v2220
        %3057 = vmatpush1.bf16.msra.mxu0 %v2219
        %3058 = vmatprep.subr.bf16.mxu0 %v2218
        %3059 = vmatpush1.bf16.msra.mxu0 %v2217
        %3060 = vmatprep.subr.bf16.mxu0 %v2216
        %3061 = vmatpush1.bf16.msra.mxu0 %v2215
        %3062 = vmatprep.subr.bf16.mxu0 %v2246
        %3063 = vmatpush2.bf16.msra.mxu0 %v2245
        %3064 = vmatprep.subr.bf16.mxu0 %v2244
        %3065 = vmatpush2.bf16.msra.mxu0 %v2243
        %3066 = vmatprep.subr.bf16.mxu0 %v2242
        %3067 = vmatpush2.bf16.msra.mxu0 %v2241
        %3068 = vmatprep.subr.bf16.mxu0 %v2240
        %3069 = vmatpush2.bf16.msra.mxu0 %v2239
        %3070 = vmatprep.subr.bf16.mxu0 %v2238
        %3071 = vmatpush2.bf16.msra.mxu0 %v2237
        %3072 = vmatprep.subr.bf16.mxu0 %v2236
        %3073 = vmatpush2.bf16.msra.mxu0 %v2235
        %3074 = vmatprep.subr.bf16.mxu0 %v2234
        %3075 = vmatpush2.bf16.msra.mxu0 %v2233
        %3076 = vmatprep.subr.bf16.mxu0 %v2232
        %3077 = vmatpush2.bf16.msra.mxu0 %v2231
        %3078 = vmatprep.mubr.bf16.mxu0 %v806
        %3079 = vmatmul.mubr.bf16.gmra.mxu0 %v805
        %v3080 = vpop.f32.mrf.mxu0
        %v3081 = vadd.f32 %v3040, %v3080
        %v3082 = vpop.f32.mrf.mxu0
        %v3083 = vadd.f32 %v3042, %v3082
        %v3084 = vpop.f32.mrf.mxu0
        %v3085 = vpop.f32.mrf.mxu0
        %3086 = vdwg.mxu0
        %3087 = vmatprep.subr.bf16.mxu0 %v2262
        %3088 = vmatpush1.bf16.msra.mxu0 %v2261
        %3089 = vmatprep.subr.bf16.mxu0 %v2260
        %3090 = vmatpush1.bf16.msra.mxu0 %v2259
        %3091 = vmatprep.subr.bf16.mxu0 %v2258
        %3092 = vmatpush1.bf16.msra.mxu0 %v2257
        %3093 = vmatprep.subr.bf16.mxu0 %v2256
        %3094 = vmatpush1.bf16.msra.mxu0 %v2255
        %3095 = vmatprep.subr.bf16.mxu0 %v2254
        %3096 = vmatpush1.bf16.msra.mxu0 %v2253
        %3097 = vmatprep.subr.bf16.mxu0 %v2252
        %3098 = vmatpush1.bf16.msra.mxu0 %v2251
        %3099 = vmatprep.subr.bf16.mxu0 %v2250
        %3100 = vmatpush1.bf16.msra.mxu0 %v2249
        %3101 = vmatprep.subr.bf16.mxu0 %v2248
        %3102 = vmatpush1.bf16.msra.mxu0 %v2247
        %3103 = vmatprep.subr.bf16.mxu0 %v2278
        %3104 = vmatpush2.bf16.msra.mxu0 %v2277
        %3105 = vmatprep.subr.bf16.mxu0 %v2276
        %3106 = vmatpush2.bf16.msra.mxu0 %v2275
        %3107 = vmatprep.subr.bf16.mxu0 %v2274
        %3108 = vmatpush2.bf16.msra.mxu0 %v2273
        %3109 = vmatprep.subr.bf16.mxu0 %v2272
        %3110 = vmatpush2.bf16.msra.mxu0 %v2271
        %3111 = vmatprep.subr.bf16.mxu0 %v2270
        %3112 = vmatpush2.bf16.msra.mxu0 %v2269
        %3113 = vmatprep.subr.bf16.mxu0 %v2268
        %3114 = vmatpush2.bf16.msra.mxu0 %v2267
        %3115 = vmatprep.subr.bf16.mxu0 %v2266
        %3116 = vmatpush2.bf16.msra.mxu0 %v2265
        %3117 = vmatprep.subr.bf16.mxu0 %v2264
        %3118 = vmatpush2.bf16.msra.mxu0 %v2263
        %3119 = vmatprep.mubr.bf16.mxu0 %v808
        %3120 = vmatmul.mubr.bf16.gmra.mxu0 %v807
        %v3121 = vpop.f32.mrf.mxu0
        %v3122 = vadd.f32 %v3081, %v3121
        %v3123 = vpop.f32.mrf.mxu0
        %v3124 = vadd.f32 %v3083, %v3123
        %v3125 = vpop.f32.mrf.mxu0
        %v3126 = vpop.f32.mrf.mxu0
        %3127 = vdwg.mxu0
        %3128 = vmatprep.subr.bf16.mxu0 %v2294
        %3129 = vmatpush1.bf16.msra.mxu0 %v2293
        %3130 = vmatprep.subr.bf16.mxu0 %v2292
        %3131 = vmatpush1.bf16.msra.mxu0 %v2291
        %3132 = vmatprep.subr.bf16.mxu0 %v2290
        %3133 = vmatpush1.bf16.msra.mxu0 %v2289
        %3134 = vmatprep.subr.bf16.mxu0 %v2288
        %3135 = vmatpush1.bf16.msra.mxu0 %v2287
        %3136 = vmatprep.subr.bf16.mxu0 %v2286
        %3137 = vmatpush1.bf16.msra.mxu0 %v2285
        %3138 = vmatprep.subr.bf16.mxu0 %v2284
        %3139 = vmatpush1.bf16.msra.mxu0 %v2283
        %3140 = vmatprep.subr.bf16.mxu0 %v2282
        %3141 = vmatpush1.bf16.msra.mxu0 %v2281
        %3142 = vmatprep.subr.bf16.mxu0 %v2280
        %3143 = vmatpush1.bf16.msra.mxu0 %v2279
        %3144 = vmatprep.subr.bf16.mxu0 %v2310
        %3145 = vmatpush2.bf16.msra.mxu0 %v2309
        %3146 = vmatprep.subr.bf16.mxu0 %v2308
        %3147 = vmatpush2.bf16.msra.mxu0 %v2307
        %3148 = vmatprep.subr.bf16.mxu0 %v2306
        %3149 = vmatpush2.bf16.msra.mxu0 %v2305
        %3150 = vmatprep.subr.bf16.mxu0 %v2304
        %3151 = vmatpush2.bf16.msra.mxu0 %v2303
        %3152 = vmatprep.subr.bf16.mxu0 %v2302
        %3153 = vmatpush2.bf16.msra.mxu0 %v2301
        %3154 = vmatprep.subr.bf16.mxu0 %v2300
        %3155 = vmatpush2.bf16.msra.mxu0 %v2299
        %3156 = vmatprep.subr.bf16.mxu0 %v2298
        %3157 = vmatpush2.bf16.msra.mxu0 %v2297
        %3158 = vmatprep.subr.bf16.mxu0 %v2296
        %3159 = vmatpush2.bf16.msra.mxu0 %v2295
        %3160 = vmatprep.mubr.bf16.mxu0 %v810
        %3161 = vmatmul.mubr.bf16.gmra.mxu0 %v809
        %v3162 = vpop.f32.mrf.mxu0
        %v3163 = vadd.f32 %v3122, %v3162
        %v3164 = vpop.f32.mrf.mxu0
        %v3165 = vadd.f32 %v3124, %v3164
        %v3166 = vpop.f32.mrf.mxu0
        %v3167 = vpop.f32.mrf.mxu0
        %3168 = vdwg.mxu0
        %3169 = vmatprep.subr.bf16.mxu0 %v2326
        %3170 = vmatpush1.bf16.msra.mxu0 %v2325
        %3171 = vmatprep.subr.bf16.mxu0 %v2324
        %3172 = vmatpush1.bf16.msra.mxu0 %v2323
        %3173 = vmatprep.subr.bf16.mxu0 %v2322
        %3174 = vmatpush1.bf16.msra.mxu0 %v2321
        %3175 = vmatprep.subr.bf16.mxu0 %v2320
        %3176 = vmatpush1.bf16.msra.mxu0 %v2319
        %3177 = vmatprep.subr.bf16.mxu0 %v2318
        %3178 = vmatpush1.bf16.msra.mxu0 %v2317
        %3179 = vmatprep.subr.bf16.mxu0 %v2316
        %3180 = vmatpush1.bf16.msra.mxu0 %v2315
        %3181 = vmatprep.subr.bf16.mxu0 %v2314
        %3182 = vmatpush1.bf16.msra.mxu0 %v2313
        %3183 = vmatprep.subr.bf16.mxu0 %v2312
        %3184 = vmatpush1.bf16.msra.mxu0 %v2311
        %3185 = vmatprep.subr.bf16.mxu0 %v2342
        %3186 = vmatpush2.bf16.msra.mxu0 %v2341
        %3187 = vmatprep.subr.bf16.mxu0 %v2340
        %3188 = vmatpush2.bf16.msra.mxu0 %v2339
        %3189 = vmatprep.subr.bf16.mxu0 %v2338
        %3190 = vmatpush2.bf16.msra.mxu0 %v2337
        %3191 = vmatprep.subr.bf16.mxu0 %v2336
        %3192 = vmatpush2.bf16.msra.mxu0 %v2335
        %3193 = vmatprep.subr.bf16.mxu0 %v2334
        %3194 = vmatpush2.bf16.msra.mxu0 %v2333
        %3195 = vmatprep.subr.bf16.mxu0 %v2332
        %3196 = vmatpush2.bf16.msra.mxu0 %v2331
        %3197 = vmatprep.subr.bf16.mxu0 %v2330
        %3198 = vmatpush2.bf16.msra.mxu0 %v2329
        %3199 = vmatprep.subr.bf16.mxu0 %v2328
        %3200 = vmatpush2.bf16.msra.mxu0 %v2327
        %3201 = vmatprep.mubr.bf16.mxu0 %v812
        %3202 = vmatmul.mubr.bf16.gmra.mxu0 %v811
        %v3203 = vpop.f32.mrf.mxu0
        %v3204 = vadd.f32 %v3163, %v3203
        %v3205 = vpop.f32.mrf.mxu0
        %v3206 = vadd.f32 %v3165, %v3205
        %v3207 = vpop.f32.mrf.mxu0
        %v3208 = vpop.f32.mrf.mxu0
        %3209 = vdwg.mxu0
        %3210 = vmatprep.subr.bf16.mxu0 %v2358
        %3211 = vmatpush1.bf16.msra.mxu0 %v2357
        %3212 = vmatprep.subr.bf16.mxu0 %v2356
        %3213 = vmatpush1.bf16.msra.mxu0 %v2355
        %3214 = vmatprep.subr.bf16.mxu0 %v2354
        %3215 = vmatpush1.bf16.msra.mxu0 %v2353
        %3216 = vmatprep.subr.bf16.mxu0 %v2352
        %3217 = vmatpush1.bf16.msra.mxu0 %v2351
        %3218 = vmatprep.subr.bf16.mxu0 %v2350
        %3219 = vmatpush1.bf16.msra.mxu0 %v2349
        %3220 = vmatprep.subr.bf16.mxu0 %v2348
        %3221 = vmatpush1.bf16.msra.mxu0 %v2347
        %3222 = vmatprep.subr.bf16.mxu0 %v2346
        %3223 = vmatpush1.bf16.msra.mxu0 %v2345
        %3224 = vmatprep.subr.bf16.mxu0 %v2344
        %3225 = vmatpush1.bf16.msra.mxu0 %v2343
        %3226 = vmatprep.subr.bf16.mxu0 %v2374
        %3227 = vmatpush2.bf16.msra.mxu0 %v2373
        %3228 = vmatprep.subr.bf16.mxu0 %v2372
        %3229 = vmatpush2.bf16.msra.mxu0 %v2371
        %3230 = vmatprep.subr.bf16.mxu0 %v2370
        %3231 = vmatpush2.bf16.msra.mxu0 %v2369
        %3232 = vmatprep.subr.bf16.mxu0 %v2368
        %3233 = vmatpush2.bf16.msra.mxu0 %v2367
        %3234 = vmatprep.subr.bf16.mxu0 %v2366
        %3235 = vmatpush2.bf16.msra.mxu0 %v2365
        %3236 = vmatprep.subr.bf16.mxu0 %v2364
        %3237 = vmatpush2.bf16.msra.mxu0 %v2363
        %3238 = vmatprep.subr.bf16.mxu0 %v2362
        %3239 = vmatpush2.bf16.msra.mxu0 %v2361
        %3240 = vmatprep.subr.bf16.mxu0 %v2360
        %3241 = vmatpush2.bf16.msra.mxu0 %v2359
        %3242 = vmatprep.mubr.bf16.mxu0 %v814
        %3243 = vmatmul.mubr.bf16.gmra.mxu0 %v813
        %v3244 = vpop.f32.mrf.mxu0
        %v3245 = vadd.f32 %v3204, %v3244
        %v3246 = vpop.f32.mrf.mxu0
        %v3247 = vadd.f32 %v3206, %v3246
        %v3248 = vpop.f32.mrf.mxu0
        %v3249 = vpop.f32.mrf.mxu0
        %3250 = vdwg.mxu0
        %v3251 = vmax.f32 %v3245, 0.0
        %v3252 = vmax.f32 %v3247, 0.0
        %v3253 = vld [vmem:[#allocation2] sm:$0xff]
        %v3254 = vld [vmem:[%s339] sm:$0xff]
        %v3255 = vld [vmem:[%s339 + $0x8] sm:$0xff]
        %v3256 = vld [vmem:[%s339 + $0x10] sm:$0xff]
        %v3257 = vld [vmem:[%s339 + $0x18] sm:$0xff]
        %v3258 = vld [vmem:[%s339 + $0x20] sm:$0xff]
        %v3259 = vld [vmem:[%s339 + $0x28] sm:$0xff]
        %v3260 = vld [vmem:[%s339 + $0x30] sm:$0xff]
        %v3261 = vld [vmem:[%s339 + $0x38] sm:$0xff]
        %v3262 = vld [vmem:[%s339 + $0x40] sm:$0xff]
        %v3263 = vld [vmem:[%s339 + $0x48] sm:$0xff]
        %v3264 = vld [vmem:[%s339 + $0x50] sm:$0xff]
        %v3265 = vld [vmem:[%s339 + $0x58] sm:$0xff]
        %v3266 = vld [vmem:[%s339 + $0x60] sm:$0xff]
        %v3267 = vld [vmem:[%s339 + $0x68] sm:$0xff]
        %v3268 = vld [vmem:[%s339 + $0x70] sm:$0xff]
        %v3269 = vld [vmem:[%s339 + $0x78] sm:$0xff]
        %v3270 = vld [vmem:[%s339 + $0x80] sm:$0xff]
        %v3271 = vld [vmem:[%s339 + $0x88] sm:$0xff]
        %v3272 = vld [vmem:[%s339 + $0x90] sm:$0xff]
        %v3273 = vld [vmem:[%s339 + $0x98] sm:$0xff]
        %v3274 = vld [vmem:[%s339 + $0xa0] sm:$0xff]
        %v3275 = vld [vmem:[%s339 + $0xa8] sm:$0xff]
        %v3276 = vld [vmem:[%s339 + $0xb0] sm:$0xff]
        %v3277 = vld [vmem:[%s339 + $0xb8] sm:$0xff]
        %v3278 = vld [vmem:[%s339 + $0xc0] sm:$0xff]
        %v3279 = vld [vmem:[%s339 + $0xc8] sm:$0xff]
        %v3280 = vld [vmem:[%s339 + $0xd0] sm:$0xff]
        %v3281 = vld [vmem:[%s339 + $0xd8] sm:$0xff]
        %v3282 = vld [vmem:[%s339 + $0xe0] sm:$0xff]
        %v3283 = vld [vmem:[%s339 + $0xe8] sm:$0xff]
        %v3284 = vld [vmem:[%s339 + $0xf0] sm:$0xff]
        %v3285 = vld [vmem:[%s339 + $0xf8] sm:$0xff]
        %3286 = vmatprep.subr.mxu0 0.0
        %3287 = vmatpush1.msra.mxu0 %v3269
        %3288 = vmatprep.subr.mxu0 0.0
        %3289 = vmatpush1.msra.mxu0 %v3268
        %3290 = vmatprep.subr.mxu0 0.0
        %3291 = vmatpush1.msra.mxu0 %v3267
        %3292 = vmatprep.subr.mxu0 0.0
        %3293 = vmatpush1.msra.mxu0 %v3266
        %3294 = vmatprep.subr.mxu0 0.0
        %3295 = vmatpush1.msra.mxu0 %v3265
        %3296 = vmatprep.subr.mxu0 0.0
        %3297 = vmatpush1.msra.mxu0 %v3264
        %3298 = vmatprep.subr.mxu0 0.0
        %3299 = vmatpush1.msra.mxu0 %v3263
        %3300 = vmatprep.subr.mxu0 0.0
        %3301 = vmatpush1.msra.mxu0 %v3262
        %3302 = vmatprep.subr.mxu0 0.0
        %3303 = vmatpush1.msra.mxu0 %v3261
        %3304 = vmatprep.subr.mxu0 0.0
        %3305 = vmatpush1.msra.mxu0 %v3260
        %3306 = vmatprep.subr.mxu0 0.0
        %3307 = vmatpush1.msra.mxu0 %v3259
        %3308 = vmatprep.subr.mxu0 0.0
        %3309 = vmatpush1.msra.mxu0 %v3258
        %3310 = vmatprep.subr.mxu0 0.0
        %3311 = vmatpush1.msra.mxu0 %v3257
        %3312 = vmatprep.subr.mxu0 0.0
        %3313 = vmatpush1.msra.mxu0 %v3256
        %3314 = vmatprep.subr.mxu0 0.0
        %3315 = vmatpush1.msra.mxu0 %v3255
        %3316 = vmatprep.subr.mxu0 0.0
        %3317 = vmatpush1.msra.mxu0 %v3254
        %3318 = vmatprep.subr.mxu0 0.0
        %3319 = vmatpush2.msra.mxu0 %v3285
        %3320 = vmatprep.subr.mxu0 0.0
        %3321 = vmatpush2.msra.mxu0 %v3284
        %3322 = vmatprep.subr.mxu0 0.0
        %3323 = vmatpush2.msra.mxu0 %v3283
        %3324 = vmatprep.subr.mxu0 0.0
        %3325 = vmatpush2.msra.mxu0 %v3282
        %3326 = vmatprep.subr.mxu0 0.0
        %3327 = vmatpush2.msra.mxu0 %v3281
        %3328 = vmatprep.subr.mxu0 0.0
        %3329 = vmatpush2.msra.mxu0 %v3280
        %3330 = vmatprep.subr.mxu0 0.0
        %3331 = vmatpush2.msra.mxu0 %v3279
        %3332 = vmatprep.subr.mxu0 0.0
        %3333 = vmatpush2.msra.mxu0 %v3278
        %3334 = vmatprep.subr.mxu0 0.0
        %3335 = vmatpush2.msra.mxu0 %v3277
        %3336 = vmatprep.subr.mxu0 0.0
        %3337 = vmatpush2.msra.mxu0 %v3276
        %3338 = vmatprep.subr.mxu0 0.0
        %3339 = vmatpush2.msra.mxu0 %v3275
        %3340 = vmatprep.subr.mxu0 0.0
        %3341 = vmatpush2.msra.mxu0 %v3274
        %3342 = vmatprep.subr.mxu0 0.0
        %3343 = vmatpush2.msra.mxu0 %v3273
        %3344 = vmatprep.subr.mxu0 0.0
        %3345 = vmatpush2.msra.mxu0 %v3272
        %3346 = vmatprep.subr.mxu0 0.0
        %3347 = vmatpush2.msra.mxu0 %v3271
        %3348 = vmatprep.subr.mxu0 0.0
        %3349 = vmatpush2.msra.mxu0 %v3270
        %3350 = vmatprep.mubr.f32.mxu0 %v3252
        %3351 = vmatmul.mubr.f32.gmra.mxu0 %v3251
        %v3352 = vpop.f32.mrf.mxu0
        %v3353 = vadd.f32 0.0, %v3352
        %v3354 = vpop.f32.mrf.mxu0
        %3355 = vdwg.mxu0
        %v3356 = vadd.f32 %v3253, %v3353
        %vm3357 = vcmask 80896
        %3358 = vst.msk [vmem:[#allocation2] sm:$0xff] %vm3357, %v3356
        %p3359 = scmp.eq.s32.totalorder %s27, 3
        // Predicated region
        $region61: #{tpu_custom_call.1} parent=39 // pred_check
          %p3360 = pneg %p3359
        $region62: #{tpu_custom_call.1} parent=39 // pred_check_branch
          %3362 = sbr.rel (%p3360) target = $region64
        $region63: #{tpu_custom_call.1} parent=39 // pred_region
          %v3363 = vld [vmem:[#allocation2] sm:$0xff]
          %v3364 = vld [vmem:[#allocation9] sm:$0x1]
          %v3366 = vlaneseq
          %v3367 = vshrl.u32 %v3366, 7
          %v3368 = vsub.s32 0, %v3367
          %v3369 = vrot.slane %v3364, %v3368
          %v3371 = vadd.f32 %v3363, %v3369
          %v3372 = vsel %vm3357, %v3371, -inf
          %3373 = vmax.xlane.f32.xlu0 %v3372
          %v3374 = vpop.xlane.xlu0 %3373
          %v3375 = vsub.f32 %v3371, %v3374
          %v3376 = vmul.f32 %v3375, 1.442695
          %v3377 = vpow.pop %v3376
          %v3378 = vsel %vm3357, %v3377, 0.0
          %3379 = vadd.xlane.f32.xlu0 %v3378
          %v3380 = vpop.xlane.xlu0 %3379
          %v3381 = vrcp.pop %v3380
          %v3382 = vmul.f32 %v3377, %v3381
          %3383 = vst.msk [vmem:[#allocation11] sm:$0xff] %vm3357, %v3382
        $region64: #{tpu_custom_call.1} parent=39 // pred_fallthru
          _
        // Predicated region
        $region65: #{tpu_custom_call.1} parent=39 // pred_check
          %p3384 = pneg %p177
        $region66: #{tpu_custom_call.1} parent=39 // pred_check_branch
          %3386 = sbr.rel (%p3384) target = $region68
        $region67: #{tpu_custom_call.1} parent=39 // pred_region
          %s3388 = ssub.s32 128, 128
          %3389 = vsyncadd [#allocation5], %s3388
          %s3390 = smul.addr %s26, 128
          %s3391 = scalar_lea.hbm %s5, %s3390
          %s3393 = sshll.u32 [#allocation11], 4
          %s3394 = int_to_ptr.vmem [resolvable:$true] %s3393
          %3396 = dma.vmem_to_hbm [thread:$0]  %s3394, 128, %s3391, [#allocation5]
        $region68: #{tpu_custom_call.1} parent=39 // pred_fallthru
          _
        // Predicated region
        $region69: #{tpu_custom_call.1} parent=39 // pred_check
          %p3397 = pneg %p177
        $region70: #{tpu_custom_call.1} parent=39 // pred_check_branch
          %3399 = sbr.rel (%p3397) target = $region72
        $region71: #{tpu_custom_call.1} parent=39 // pred_region
          %3400 = dma.done [#allocation5], 128
        $region72: #{tpu_custom_call.1} parent=39 // pred_fallthru
          _
      $region40: #{tpu_custom_call.1} parent=5 // pred_fallthru
        _
      %p3401 = scmp.le.s32.totalorder 2, %s17
      // Predicated region
      $region73: #{tpu_custom_call.1} parent=5 // pred_check
        %p3402 = pneg %p3401
      $region74: #{tpu_custom_call.1} parent=5 // pred_check_branch
        %3404 = sbr.rel (%p3402) target = $region76
      $region75: #{tpu_custom_call.1} parent=5 // pred_region
        %s3405 = ssub.s32 %s17, 2
      $region76: #{tpu_custom_call.1} parent=5 // pred_fallthru
        _
    $region6: #{tpu_custom_call.1} parent=1 // loop_footer
      %s21 = sadd.s32 1, %s17
    $region7: #{tpu_custom_call.1} parent=1 // loop_footer_branch
      %16 = sbr.rel target = $region3
    $region8: #{tpu_custom_call.1} parent=1 // loop_exit
      _
    %3406 = vsyncpa [#allocation4], 1
    %s3407 = scalar_lea.sflag [#allocation4], 1
    %3408 = vsyncpa %s3407, 1
    %3409 = vsyncpa [#allocation7], 1
    %s3410 = scalar_lea.sflag [#allocation7], 1
    %3411 = vsyncpa %s3410, 1
    %3412 = vsyncpa [#allocation10], 1
    %3413 = vsyncpa [#allocation5], 1
    %s3414 = scalar_lea.sflag [#allocation5], 1
    %3415 = vsyncpa %s3414, 1

</llo_original>
